<compile_context>
chip_gen: v6e
topology: v6e:2x2x1
jax: 0.10.0
libtpu: 0.0.40
codegen_flags: <defaults>
</compile_context>

<pallas_src>
import functools

import jax
import jax.numpy as jnp
from jax import lax
from jax.experimental import pallas as pl
from jax.experimental.pallas import tpu as pltpu


# -----------------------------------------------------------------------------
# tiling helpers
# -----------------------------------------------------------------------------
def _pick_batch_tile(b):
    # Keep the second-minor block dim a multiple of 8 (or the full dim).
    if b % 8 == 0:
        for cand in (128, 64, 32, 16, 8):
            if b % cand == 0:
                return cand
    return b


def _pick_hw_chunk(hw):
    # Lane-aligned HW chunks so the spatial pool is pipelined over the grid.
    if hw % 128 == 0:
        for cand in (512, 256, 128):
            if hw % cand == 0 and hw > cand:
                return cand
    return hw


def _vmem_limit(est_bytes):
    # Explicit scoped-VMEM budget: generous headroom, but <= 48 MiB so the
    # same tiling is valid on v7x (64 MiB physical / 32 MiB default scoped).
    return int(min(48 * 1024 * 1024, max(16 * 1024 * 1024, 2 * est_bytes)))


# -----------------------------------------------------------------------------
# Kernel 1: encoders + projections.  grid = (batch tiles, HW chunks)
# -----------------------------------------------------------------------------
def _encode_project_kernel(
    img_ref, ctx_ref, cap_ref, chan_sel_ref, batch_sel_ref,
    wei_ref, bei_ref, wec_ref, bec_ref, wek_ref, bek_ref,
    wpi_ref, bpi_ref, wpc_ref, bpc_ref, wpk_ref, bpk_ref,
    proj_ref,
    acc_ref,
    *, inv_hw,
):
    f32 = jnp.float32
    bf16 = jnp.bfloat16
    h = pl.program_id(1)

    @pl.when(h == 0)
    def _():
        acc_ref[...] = jnp.zeros_like(acc_ref)

    # Partial spatial sum for this HW chunk: (TB*C, THW) -> (TB*C, 1), f32.
    acc_ref[...] += jnp.sum(img_ref[...].astype(f32), axis=-1, keepdims=True)

    @pl.when(h == pl.num_programs(1) - 1)
    def _():
        # (TB*C, 1) row sums -> (TB, C) pooled image via a tiny masked MXU
        # matmul (avoids an in-kernel minor-dim reshape/relayout):
        #   pool[b, c] = sum_r batch_sel[b, r] * (acc[r] * chan_sel[r, c]) / HW
        pooled_rows = acc_ref[...] * chan_sel_ref[...]                  # (TB*C, C)
        img_pool = jnp.dot(batch_sel_ref[...], pooled_rows,
                           preferred_element_type=f32) * inv_hw          # (TB, C)

        # Per-batch sequence mean pooling (sublane reduce), all in f32.
        ctx_pool = jnp.mean(ctx_ref[...].astype(f32), axis=1)            # (TB, Dc)
        cap_pool = jnp.mean(cap_ref[...].astype(f32), axis=1)            # (TB, Dk)

        # Encoder linears: bf16 operands at the MXU boundary, f32 accumulation,
        # bias adds in f32.
        img_feat = jnp.dot(img_pool.astype(bf16), wei_ref[...],
                           preferred_element_type=f32) + bei_ref[...]
        ctx_feat = jnp.dot(ctx_pool.astype(bf16), wec_ref[...],
                           preferred_element_type=f32) + bec_ref[...]
        cap_feat = jnp.dot(cap_pool.astype(bf16), wek_ref[...],
                           preferred_element_type=f32) + bek_ref[...]

        # Projections, same dtype policy.
        img_p = jnp.dot(img_feat.astype(bf16), wpi_ref[...],
                        preferred_element_type=f32) + bpi_ref[...]
        ctx_p = jnp.dot(ctx_feat.astype(bf16), wpc_ref[...],
                        preferred_element_type=f32) + bpc_ref[...]
        cap_p = jnp.dot(cap_feat.astype(bf16), wpk_ref[...],
                        preferred_element_type=f32) + bpk_ref[...]

        # Single lane-dense output slab [img | ctx | cap], f32.
        proj_ref[...] = jnp.concatenate([img_p, ctx_p, cap_p], axis=-1)


# -----------------------------------------------------------------------------
# Kernel 2: similarities.  grid = (batch row tiles,)
# -----------------------------------------------------------------------------
def _similarity_kernel(q_ref, kv_ref, out_ref, *, attn_dim):
    f32 = jnp.float32
    a = attn_dim
    q = q_ref[...].astype(f32)      # (TB, 3A) rows of this tile
    kv = kv_ref[...].astype(f32)    # (B, 3A)  all projected features

    q_img = q[:, :a]
    q_ctx = q[:, a:2 * a]
    k_ctx = kv[:, a:2 * a]
    k_cap = kv[:, 2 * a:]

    # a @ b.T expressed as a feature-axis contraction (no XLU transpose before
    # the MXU push).  Kept in f32: these are a negligible FLOP fraction.
    dn = (((1,), (1,)), ((), ()))
    s_ic = lax.dot_general(q_img, k_ctx, dn, preferred_element_type=f32)
    s_ik = lax.dot_general(q_img, k_cap, dn, preferred_element_type=f32)
    s_ck = lax.dot_general(q_ctx, k_cap, dn, preferred_element_type=f32)

    # One lane-dense (TB, 3B) store instead of three narrow (TB, B) buffers.
    out_ref[...] = jnp.concatenate([s_ic, s_ik, s_ck], axis=-1)


# -----------------------------------------------------------------------------
# Forward (Pallas) and a plain-JAX f32 reference for validation.
# -----------------------------------------------------------------------------
@jax.jit
def contrastive_forward(image, context, caption, params):
    B, C, H, W = image.shape
    _, S, d_ctx = context.shape
    d_cap = caption.shape[-1]
    e_img = params["w_enc_img"].shape[1]
    e_ctx = params["w_enc_ctx"].shape[1]
    e_cap = params["w_enc_cap"].shape[1]
    a = params["w_proj_img"].shape[1]
    HW = H * W

    tb = _pick_batch_tile(B)
    thw = _pick_hw_chunk(HW)
    n_bt, n_hw = B // tb, HW // thw

    # Free leading-dim merge: batch*channel dense on sublanes, HW on lanes.
    img2d = image.astype(jnp.float32).reshape(B * C, HW)

    # Per-batch-tile selection constants for the pooled-image rearrangement.
    # These are O(TB^2*C) (tiny, VMEM-resident), NOT the O(B^2*S) pooling
    # matrix that was removed.
    chan_sel = jnp.tile(jnp.eye(C, dtype=jnp.float32), (tb, 1))            # (TB*C, C)
    batch_sel = jnp.kron(jnp.eye(tb, dtype=jnp.float32),
                         jnp.ones((1, C), jnp.float32))                    # (TB, TB*C)

    # Weights stored bf16 (halves weight DMA, native MXU); biases stay f32.
    bf16 = jnp.bfloat16
    weight_ops = (
        params["w_enc_img"].astype(bf16), params["b_enc_img"].astype(jnp.float32),
        params["w_enc_ctx"].astype(bf16), params["b_enc_ctx"].astype(jnp.float32),
        params["w_enc_cap"].astype(bf16), params["b_enc_cap"].astype(jnp.float32),
        params["w_proj_img"].astype(bf16), params["b_proj_img"].astype(jnp.float32),
        params["w_proj_ctx"].astype(bf16), params["b_proj_ctx"].astype(jnp.float32),
        params["w_proj_cap"].astype(bf16), params["b_proj_cap"].astype(jnp.float32),
    )

    in_specs = [
        pl.BlockSpec((tb * C, thw), lambda i, h: (i, h)),          # image chunks
        pl.BlockSpec((tb, S, d_ctx), lambda i, h: (i, 0, 0)),      # context tokens
        pl.BlockSpec((tb, S, d_cap), lambda i, h: (i, 0, 0)),      # caption tokens
        pl.BlockSpec(chan_sel.shape, lambda i, h: (0, 0)),
        pl.BlockSpec(batch_sel.shape, lambda i, h: (0, 0)),
    ] + [pl.BlockSpec(w.shape, lambda i, h: (0, 0)) for w in weight_ops]
    out_specs = pl.BlockSpec((tb, 3 * a), lambda i, h: (i, 0))

    weight_bytes = sum(int(w.size) * w.dtype.itemsize for w in weight_ops)
    vmem_est1 = (
        2 * (tb * C * thw * 4)                     # double-buffered image chunk
        + 2 * tb * S * (d_ctx + d_cap) * 4         # token slabs
        + 2 * tb * 3 * a * 4                       # projected output block
        + weight_bytes
        + (chan_sel.size + batch_sel.size) * 4
        + tb * C * 128 * 4                         # accumulator scratch (lane-padded)
    )
    flops1 = (
        B * C * HW + B * S * (d_ctx + d_cap)
        + 2 * B * (C * e_img + d_ctx * e_ctx + d_cap * e_cap)
        + 2 * B * a * (e_img + e_ctx + e_cap)
    )
    bytes1 = 4 * B * C * HW + 4 * B * S * (d_ctx + d_cap) + weight_bytes + 4 * B * 3 * a

    proj_all = pl.pallas_call(
        functools.partial(_encode_project_kernel, inv_hw=1.0 / HW),
        out_shape=jax.ShapeDtypeStruct((B, 3 * a), jnp.float32),
        grid=(n_bt, n_hw),
        in_specs=in_specs,
        out_specs=out_specs,
        scratch_shapes=[pltpu.VMEM((tb * C, 1), jnp.float32)],
        compiler_params=pltpu.CompilerParams(
            dimension_semantics=("parallel", "arbitrary"),
            vmem_limit_bytes=_vmem_limit(vmem_est1)),
        cost_estimate=pl.CostEstimate(
            flops=int(flops1), transcendentals=0, bytes_accessed=int(bytes1)),
    )(img2d, context, caption, chan_sel, batch_sel, *weight_ops)

    vmem_est2 = 2 * tb * 3 * a * 4 + B * 3 * a * 4 + 2 * tb * 3 * B * 4
    sims = pl.pallas_call(
        functools.partial(_similarity_kernel, attn_dim=a),
        out_shape=jax.ShapeDtypeStruct((B, 3 * B), jnp.float32),
        grid=(n_bt,),
        in_specs=[pl.BlockSpec((tb, 3 * a), lambda i: (i, 0)),
                  pl.BlockSpec((B, 3 * a), lambda i: (0, 0))],
        out_specs=pl.BlockSpec((tb, 3 * B), lambda i: (i, 0)),
        compiler_params=pltpu.CompilerParams(
            dimension_semantics=("parallel",),
            vmem_limit_bytes=_vmem_limit(vmem_est2)),
        cost_estimate=pl.CostEstimate(
            flops=int(2 * 3 * B * B * a), transcendentals=0,
            bytes_accessed=int(4 * (2 * B * 3 * a + B * 3 * B))),
    )(proj_all, proj_all)

    # Reversed pairs are exact transposes (same products / reduction order).
    s_ic = sims[:, :B]
    s_ik = sims[:, B:2 * B]
    s_ck = sims[:, 2 * B:]
    return s_ic, s_ic.T, s_ik, s_ik.T, s_ck, s_ck.T


def contrastive_forward_ref(image, context, caption, params):
    B, C, H, W = image.shape
    img_pool = jnp.mean(image.astype(jnp.float32).reshape(B, C, H * W), axis=-1)
    ctx_pool = jnp.mean(context.astype(jnp.float32), axis=1)
    cap_pool = jnp.mean(caption.astype(jnp.float32), axis=1)

    img_feat = img_pool @ params["w_enc_img"] + params["b_enc_img"]
    ctx_feat = ctx_pool @ params["w_enc_ctx"] + params["b_enc_ctx"]
    cap_feat = cap_pool @ params["w_enc_cap"] + params["b_enc_cap"]

    img_p = img_feat @ params["w_proj_img"] + params["b_proj_img"]
    ctx_p = ctx_feat @ params["w_proj_ctx"] + params["b_proj_ctx"]
    cap_p = cap_feat @ params["w_proj_cap"] + params["b_proj_cap"]

    return (img_p @ ctx_p.T, ctx_p @ img_p.T,
            img_p @ cap_p.T, cap_p @ img_p.T,
            ctx_p @ cap_p.T, cap_p @ ctx_p.T)


# -----------------------------------------------------------------------------
# Deterministic parameter init + demo.
# -----------------------------------------------------------------------------
def init_params(key, *, C, D_ctx, D_cap, E_img, E_ctx, E_cap, attn_dim):
    ks = jax.random.split(key, 12)

    def lin(kw, kb, fan_in, fan_out):
        bound = 1.0 / jnp.sqrt(fan_in)
        w = jax.random.uniform(kw, (fan_in, fan_out), jnp.float32, -bound, bound)
        b = jax.random.uniform(kb, (1, fan_out), jnp.float32, -bound, bound)
        return w, b

    w_ei, b_ei = lin(ks[0], ks[1], C, E_img)
    w_ec, b_ec = lin(ks[2], ks[3], D_ctx, E_ctx)
    w_ek, b_ek = lin(ks[4], ks[5], D_cap, E_cap)
    w_pi, b_pi = lin(ks[6], ks[7], E_img, attn_dim)
    w_pc, b_pc = lin(ks[8], ks[9], E_ctx, attn_dim)
    w_pk, b_pk = lin(ks[10], ks[11], E_cap, attn_dim)

    return {
        "w_enc_img": w_ei, "b_enc_img": b_ei,
        "w_enc_ctx": w_ec, "b_enc_ctx": b_ec,
        "w_enc_cap": w_ek, "b_enc_cap": b_ek,
        "w_proj_img": w_pi, "b_proj_img": b_pi,
        "w_proj_ctx": w_pc, "b_proj_ctx": b_pc,
        "w_proj_cap": w_pk, "b_proj_cap": b_pk,
        # temperature is only used in compute_loss, kept for parity
        "temperature": jnp.array(0.07, jnp.float32),
    }


if __name__ == "__main__":
    # Small shapes consistent with the module's forward signature.
    B, C, H, W = 2, 4, 16, 16         # image: NCHW  (HW=256 -> 2 chunks of 128)
    S, D_ctx, D_cap = 8, 32, 32       # context / caption: [B, S, D]
    E_img, E_ctx, E_cap = 32, 48, 64  # encoder embed dims
    ATTN_DIM = 32                     # contrastive attn_feature_dim

    key = jax.random.PRNGKey(0)
    k_img, k_ctx, k_cap, k_par = jax.random.split(key, 4)

    image = jax.random.normal(k_img, (B, C, H, W), jnp.float32)
    context = jax.random.normal(k_ctx, (B, S, D_ctx), jnp.float32)
    caption = jax.random.normal(k_cap, (B, S, D_cap), jnp.float32)

    params = init_params(
        k_par, C=C, D_ctx=D_ctx, D_cap=D_cap,
        E_img=E_img, E_ctx=E_ctx, E_cap=E_cap, attn_dim=ATTN_DIM,
    )

    sims = contrastive_forward(image, context, caption, params)
    sims = jax.block_until_ready(sims)

    refs = contrastive_forward_ref(image, context, caption, params)
    # Encoder/projection matmuls intentionally use bf16 weights/operands
    # (f32 accumulation); similarities are f32 -> relaxed tolerance vs f32 ref.
    for got, want in zip(sims, refs):
        assert got.shape == (B, B)
        assert jnp.allclose(got, want, atol=5e-2, rtol=5e-2), (got, want)

    print("KERNEL_OK")
</pallas_src>

<mosaic_0001>
module attributes {stable_mosaic.version = 11 : i64} {
  func.func @_similarity_kernel(%arg0: i32, %arg1: memref<2x96xf32, #tpu.memory_space<vmem>>, %arg2: memref<2x96xf32, #tpu.memory_space<vmem>>, %arg3: memref<2x6xf32, #tpu.memory_space<vmem>>) attributes {dimension_semantics = [#tpu.dimension_semantics<parallel>], iteration_bounds = array<i64: 1>, scalar_prefetch = 0 : i64, scratch_operands = 0 : i64, tpu.core_type = #tpu.core_type<tc>, window_params = [{transform_indices = @transform_0, window_bounds = array<i64: 2, 96>}, {pipeline_mode = #tpu.pipeline_mode<synchronous>, transform_indices = @transform_1, window_bounds = array<i64: 2, 96>}, {transform_indices = @transform_2, window_bounds = array<i64: 2, 6>}]} {
    %c0 = arith.constant 0 : index
    %c0_0 = arith.constant 0 : index
    %0 = vector.load %arg1[%c0, %c0_0] : memref<2x96xf32, #tpu.memory_space<vmem>>, vector<2x96xf32>
    %c0_1 = arith.constant 0 : index
    %c0_2 = arith.constant 0 : index
    %1 = vector.load %arg2[%c0_1, %c0_2] : memref<2x96xf32, #tpu.memory_space<vmem>>, vector<2x96xf32>
    %2 = vector.extract_strided_slice %0 {offsets = [0, 0], sizes = [2, 32], strides = [1, 1]} : vector<2x96xf32> to vector<2x32xf32>
    %3 = vector.extract_strided_slice %0 {offsets = [0, 32], sizes = [2, 32], strides = [1, 1]} : vector<2x96xf32> to vector<2x32xf32>
    %4 = vector.extract_strided_slice %1 {offsets = [0, 32], sizes = [2, 32], strides = [1, 1]} : vector<2x96xf32> to vector<2x32xf32>
    %5 = vector.extract_strided_slice %1 {offsets = [0, 64], sizes = [2, 32], strides = [1, 1]} : vector<2x96xf32> to vector<2x32xf32>
    %cst = arith.constant dense<0.000000e+00> : vector<2x2xf32>
    %6 = tpu.matmul %2, %4, %cst {dimension_numbers = #tpu.dot_dimension_numbers<[1], [1], [0], [0], [0, 0, 1, 0], [], []>} : vector<2x32xf32>, vector<2x32xf32>, vector<2x2xf32> -> vector<2x2xf32>
    %cst_3 = arith.constant dense<0.000000e+00> : vector<2x2xf32>
    %7 = tpu.matmul %2, %5, %cst_3 {dimension_numbers = #tpu.dot_dimension_numbers<[1], [1], [0], [0], [0, 0, 1, 0], [], []>} : vector<2x32xf32>, vector<2x32xf32>, vector<2x2xf32> -> vector<2x2xf32>
    %cst_4 = arith.constant dense<0.000000e+00> : vector<2x2xf32>
    %8 = tpu.matmul %3, %5, %cst_4 {dimension_numbers = #tpu.dot_dimension_numbers<[1], [1], [0], [0], [0, 0, 1, 0], [], []>} : vector<2x32xf32>, vector<2x32xf32>, vector<2x2xf32> -> vector<2x2xf32>
    %9 = tpu.concatenate %6, %7, %8 in 1 : vector<2x2xf32>, vector<2x2xf32>, vector<2x2xf32> -> vector<2x6xf32>
    %c0_5 = arith.constant 0 : index
    %c0_6 = arith.constant 0 : index
    %10 = vector.load %arg3[%c0_5, %c0_6] : memref<2x6xf32, #tpu.memory_space<vmem>>, vector<2x6xf32>
    tpu.vector_store %arg3[%c0_5, %c0_6], %9 {strides = array<i32>} : memref<2x6xf32, #tpu.memory_space<vmem>>, vector<2x6xf32>,
    return
  }
  func.func @transform_0(%arg0: i32) -> (i32, i32) {
    %c0_i32 = arith.constant 0 : i32
    %c0_i32_0 = arith.constant 0 : i32
    return %arg0, %c0_i32 : i32, i32
  }
  func.func @transform_1(%arg0: i32) -> (i32, i32) {
    %c0_i32 = arith.constant 0 : i32
    %c0_i32_0 = arith.constant 0 : i32
    %c0_i32_1 = arith.constant 0 : i32
    return %c0_i32, %c0_i32_0 : i32, i32
  }
  func.func @transform_2(%arg0: i32) -> (i32, i32) {
    %c0_i32 = arith.constant 0 : i32
    %c0_i32_0 = arith.constant 0 : i32
    return %arg0, %c0_i32 : i32, i32
  }
}

module attributes {stable_mosaic.version = 11 : i64} {
  func.func @_encode_project_kernel(%arg0: i32, %arg1: i32, %arg2: memref<8x128xf32, #tpu.memory_space<vmem>>, %arg3: memref<2x8x32xf32, #tpu.memory_space<vmem>>, %arg4: memref<2x8x32xf32, #tpu.memory_space<vmem>>, %arg5: memref<8x4xf32, #tpu.memory_space<vmem>>, %arg6: memref<2x8xf32, #tpu.memory_space<vmem>>, %arg7: memref<4x32xbf16, #tpu.memory_space<vmem>>, %arg8: memref<1x32xf32, #tpu.memory_space<vmem>>, %arg9: memref<32x48xbf16, #tpu.memory_space<vmem>>, %arg10: memref<1x48xf32, #tpu.memory_space<vmem>>, %arg11: memref<32x64xbf16, #tpu.memory_space<vmem>>, %arg12: memref<1x64xf32, #tpu.memory_space<vmem>>, %arg13: memref<32x32xbf16, #tpu.memory_space<vmem>>, %arg14: memref<1x32xf32, #tpu.memory_space<vmem>>, %arg15: memref<48x32xbf16, #tpu.memory_space<vmem>>, %arg16: memref<1x32xf32, #tpu.memory_space<vmem>>, %arg17: memref<64x32xbf16, #tpu.memory_space<vmem>>, %arg18: memref<1x32xf32, #tpu.memory_space<vmem>>, %arg19: memref<2x96xf32, #tpu.memory_space<vmem>>, %arg20: memref<8x1xf32, #tpu.memory_space<vmem>>) attributes {dimension_semantics = [#tpu.dimension_semantics<parallel>, #tpu.dimension_semantics<arbitrary>], iteration_bounds = array<i64: 1, 2>, scalar_prefetch = 0 : i64, scratch_operands = 1 : i64, tpu.core_type = #tpu.core_type<tc>, window_params = [{transform_indices = @transform_0, window_bounds = array<i64: 8, 128>}, {transform_indices = @transform_1, window_bounds = array<i64: 2, 8, 32>}, {transform_indices = @transform_2, window_bounds = array<i64: 2, 8, 32>}, {pipeline_mode = #tpu.pipeline_mode<synchronous>, transform_indices = @transform_3, window_bounds = array<i64: 8, 4>}, {pipeline_mode = #tpu.pipeline_mode<synchronous>, transform_indices = @transform_4, window_bounds = array<i64: 2, 8>}, {pipeline_mode = #tpu.pipeline_mode<synchronous>, transform_indices = @transform_5, window_bounds = array<i64: 4, 32>}, {pipeline_mode = #tpu.pipeline_mode<synchronous>, transform_indices = @transform_6, window_bounds = array<i64: 1, 32>}, {pipeline_mode = #tpu.pipeline_mode<synchronous>, transform_indices = @transform_7, window_bounds = array<i64: 32, 48>}, {pipeline_mode = #tpu.pipeline_mode<synchronous>, transform_indices = @transform_8, window_bounds = array<i64: 1, 48>}, {pipeline_mode = #tpu.pipeline_mode<synchronous>, transform_indices = @transform_9, window_bounds = array<i64: 32, 64>}, {pipeline_mode = #tpu.pipeline_mode<synchronous>, transform_indices = @transform_10, window_bounds = array<i64: 1, 64>}, {pipeline_mode = #tpu.pipeline_mode<synchronous>, transform_indices = @transform_11, window_bounds = array<i64: 32, 32>}, {pipeline_mode = #tpu.pipeline_mode<synchronous>, transform_indices = @transform_12, window_bounds = array<i64: 1, 32>}, {pipeline_mode = #tpu.pipeline_mode<synchronous>, transform_indices = @transform_13, window_bounds = array<i64: 48, 32>}, {pipeline_mode = #tpu.pipeline_mode<synchronous>, transform_indices = @transform_14, window_bounds = array<i64: 1, 32>}, {pipeline_mode = #tpu.pipeline_mode<synchronous>, transform_indices = @transform_15, window_bounds = array<i64: 64, 32>}, {pipeline_mode = #tpu.pipeline_mode<synchronous>, transform_indices = @transform_16, window_bounds = array<i64: 1, 32>}, {transform_indices = @transform_17, window_bounds = array<i64: 2, 96>}]} {
    %c0_i32 = arith.constant 0 : i32
    %0 = arith.cmpi eq, %arg1, %c0_i32 : i32
    %1 = arith.extui %0 : i1 to i32
    %c0_i32_0 = arith.constant 0 : i32
    %2 = arith.cmpi ne, %1, %c0_i32_0 : i32
    scf.if %2 {
      %cst_7 = arith.constant 0.000000e+00 : f32
      %12 = vector.broadcast %cst_7 : f32 to vector<8x1xf32>
      %c0_8 = arith.constant 0 : index
      %c0_9 = arith.constant 0 : index
      %13 = vector.load %arg20[%c0_8, %c0_9] : memref<8x1xf32, #tpu.memory_space<vmem>>, vector<8x1xf32>
      tpu.vector_store %arg20[%c0_8, %c0_9], %12 {strides = array<i32>} : memref<8x1xf32, #tpu.memory_space<vmem>>, vector<8x1xf32>,
    } else {
    }
    %c0 = arith.constant 0 : index
    %c0_1 = arith.constant 0 : index
    %3 = vector.load %arg20[%c0, %c0_1] : memref<8x1xf32, #tpu.memory_space<vmem>>, vector<8x1xf32>
    %c0_2 = arith.constant 0 : index
    %c0_3 = arith.constant 0 : index
    %4 = vector.load %arg2[%c0_2, %c0_3] : memref<8x128xf32, #tpu.memory_space<vmem>>, vector<8x128xf32>
    %cst = arith.constant dense<0.000000e+00> : vector<8xf32>
    %5 = vector.multi_reduction <add>, %4, %cst [1] : vector<8x128xf32> to vector<8xf32>
    %6 = vector.shape_cast %5 : vector<8xf32> to vector<8x1xf32>
    %7 = arith.addf %3, %6 : vector<8x1xf32>
    %c0_4 = arith.constant 0 : index
    %c0_5 = arith.constant 0 : index
    %8 = vector.load %arg20[%c0_4, %c0_5] : memref<8x1xf32, #tpu.memory_space<vmem>>, vector<8x1xf32>
    tpu.vector_store %arg20[%c0_4, %c0_5], %7 {strides = array<i32>} : memref<8x1xf32, #tpu.memory_space<vmem>>, vector<8x1xf32>,
    %c1_i32 = arith.constant 1 : i32
    %9 = arith.cmpi eq, %arg1, %c1_i32 : i32
    %10 = arith.extui %9 : i1 to i32
    %c0_i32_6 = arith.constant 0 : i32
    %11 = arith.cmpi ne, %10, %c0_i32_6 : i32
    scf.if %11 {
      %c0_7 = arith.constant 0 : index
      %c0_8 = arith.constant 0 : index
      %12 = vector.load %arg20[%c0_7, %c0_8] : memref<8x1xf32, #tpu.memory_space<vmem>>, vector<8x1xf32>
      %c0_9 = arith.constant 0 : index
      %c0_10 = arith.constant 0 : index
      %13 = vector.load %arg5[%c0_9, %c0_10] : memref<8x4xf32, #tpu.memory_space<vmem>>, vector<8x4xf32>
      %14 = vector.broadcast %12 : vector<8x1xf32> to vector<8x4xf32>
      %15 = arith.mulf %14, %13 : vector<8x4xf32>
      %c0_11 = arith.constant 0 : index
      %c0_12 = arith.constant 0 : index
      %16 = vector.load %arg6[%c0_11, %c0_12] : memref<2x8xf32, #tpu.memory_space<vmem>>, vector<2x8xf32>
      %cst_13 = arith.constant dense<0.000000e+00> : vector<2x4xf32>
      %17 = tpu.matmul %16, %15, %cst_13 {dimension_numbers = #tpu.dot_dimension_numbers<[1], [0], [0], [1], [0, 0, 1, 1], [], []>} : vector<2x8xf32>, vector<8x4xf32>, vector<2x4xf32> -> vector<2x4xf32>
      %cst_14 = arith.constant 3.906250e-03 : f32
      %18 = vector.broadcast %cst_14 : f32 to vector<2x4xf32>
      %19 = arith.mulf %17, %18 : vector<2x4xf32>
      %c0_15 = arith.constant 0 : index
      %c0_16 = arith.constant 0 : index
      %c0_17 = arith.constant 0 : index
      %20 = vector.load %arg3[%c0_15, %c0_16, %c0_17] : memref<2x8x32xf32, #tpu.memory_space<vmem>>, vector<2x8x32xf32>
      %cst_18 = arith.constant dense<0.000000e+00> : vector<2x32xf32>
      %21 = vector.multi_reduction <add>, %20, %cst_18 [1] : vector<2x8x32xf32> to vector<2x32xf32>
      %cst_19 = arith.constant 8.000000e+00 : f32
      %22 = vector.broadcast %cst_19 : f32 to vector<2x32xf32>
      %23 = arith.divf %21, %22 : vector<2x32xf32>
      %c0_20 = arith.constant 0 : index
      %c0_21 = arith.constant 0 : index
      %c0_22 = arith.constant 0 : index
      %24 = vector.load %arg4[%c0_20, %c0_21, %c0_22] : memref<2x8x32xf32, #tpu.memory_space<vmem>>, vector<2x8x32xf32>
      %cst_23 = arith.constant dense<0.000000e+00> : vector<2x32xf32>
      %25 = vector.multi_reduction <add>, %24, %cst_23 [1] : vector<2x8x32xf32> to vector<2x32xf32>
      %cst_24 = arith.constant 8.000000e+00 : f32
      %26 = vector.broadcast %cst_24 : f32 to vector<2x32xf32>
      %27 = arith.divf %25, %26 : vector<2x32xf32>
      %28 = arith.truncf %19 : vector<2x4xf32> to vector<2x4xbf16>
      %c0_25 = arith.constant 0 : index
      %c0_26 = arith.constant 0 : index
      %29 = vector.load %arg7[%c0_25, %c0_26] : memref<4x32xbf16, #tpu.memory_space<vmem>>, vector<4x32xbf16>
      %cst_27 = arith.constant dense<0.000000e+00> : vector<2x32xf32>
      %30 = tpu.matmul %28, %29, %cst_27 {dimension_numbers = #tpu.dot_dimension_numbers<[1], [0], [0], [1], [0, 0, 1, 1], [], []>} : vector<2x4xbf16>, vector<4x32xbf16>, vector<2x32xf32> -> vector<2x32xf32>
      %c0_28 = arith.constant 0 : index
      %c0_29 = arith.constant 0 : index
      %31 = vector.load %arg8[%c0_28, %c0_29] : memref<1x32xf32, #tpu.memory_space<vmem>>, vector<1x32xf32>
      %32 = vector.broadcast %31 : vector<1x32xf32> to vector<2x32xf32>
      %33 = arith.addf %30, %32 : vector<2x32xf32>
      %34 = arith.truncf %23 : vector<2x32xf32> to vector<2x32xbf16>
      %c0_30 = arith.constant 0 : index
      %c0_31 = arith.constant 0 : index
      %35 = vector.load %arg9[%c0_30, %c0_31] : memref<32x48xbf16, #tpu.memory_space<vmem>>, vector<32x48xbf16>
      %cst_32 = arith.constant dense<0.000000e+00> : vector<2x48xf32>
      %36 = tpu.matmul %34, %35, %cst_32 {dimension_numbers = #tpu.dot_dimension_numbers<[1], [0], [0], [1], [0, 0, 1, 1], [], []>} : vector<2x32xbf16>, vector<32x48xbf16>, vector<2x48xf32> -> vector<2x48xf32>
      %c0_33 = arith.constant 0 : index
      %c0_34 = arith.constant 0 : index
      %37 = vector.load %arg10[%c0_33, %c0_34] : memref<1x48xf32, #tpu.memory_space<vmem>>, vector<1x48xf32>
      %38 = vector.broadcast %37 : vector<1x48xf32> to vector<2x48xf32>
      %39 = arith.addf %36, %38 : vector<2x48xf32>
      %40 = arith.truncf %27 : vector<2x32xf32> to vector<2x32xbf16>
      %c0_35 = arith.constant 0 : index
      %c0_36 = arith.constant 0 : index
      %41 = vector.load %arg11[%c0_35, %c0_36] : memref<32x64xbf16, #tpu.memory_space<vmem>>, vector<32x64xbf16>
      %cst_37 = arith.constant dense<0.000000e+00> : vector<2x64xf32>
      %42 = tpu.matmul %40, %41, %cst_37 {dimension_numbers = #tpu.dot_dimension_numbers<[1], [0], [0], [1], [0, 0, 1, 1], [], []>} : vector<2x32xbf16>, vector<32x64xbf16>, vector<2x64xf32> -> vector<2x64xf32>
      %c0_38 = arith.constant 0 : index
      %c0_39 = arith.constant 0 : index
      %43 = vector.load %arg12[%c0_38, %c0_39] : memref<1x64xf32, #tpu.memory_space<vmem>>, vector<1x64xf32>
      %44 = vector.broadcast %43 : vector<1x64xf32> to vector<2x64xf32>
      %45 = arith.addf %42, %44 : vector<2x64xf32>
      %46 = arith.truncf %33 : vector<2x32xf32> to vector<2x32xbf16>
      %c0_40 = arith.constant 0 : index
      %c0_41 = arith.constant 0 : index
      %47 = vector.load %arg13[%c0_40, %c0_41] : memref<32x32xbf16, #tpu.memory_space<vmem>>, vector<32x32xbf16>
      %cst_42 = arith.constant dense<0.000000e+00> : vector<2x32xf32>
      %48 = tpu.matmul %46, %47, %cst_42 {dimension_numbers = #tpu.dot_dimension_numbers<[1], [0], [0], [1], [0, 0, 1, 1], [], []>} : vector<2x32xbf16>, vector<32x32xbf16>, vector<2x32xf32> -> vector<2x32xf32>
      %c0_43 = arith.constant 0 : index
      %c0_44 = arith.constant 0 : index
      %49 = vector.load %arg14[%c0_43, %c0_44] : memref<1x32xf32, #tpu.memory_space<vmem>>, vector<1x32xf32>
      %50 = vector.broadcast %49 : vector<1x32xf32> to vector<2x32xf32>
      %51 = arith.addf %48, %50 : vector<2x32xf32>
      %52 = arith.truncf %39 : vector<2x48xf32> to vector<2x48xbf16>
      %c0_45 = arith.constant 0 : index
      %c0_46 = arith.constant 0 : index
      %53 = vector.load %arg15[%c0_45, %c0_46] : memref<48x32xbf16, #tpu.memory_space<vmem>>, vector<48x32xbf16>
      %cst_47 = arith.constant dense<0.000000e+00> : vector<2x32xf32>
      %54 = tpu.matmul %52, %53, %cst_47 {dimension_numbers = #tpu.dot_dimension_numbers<[1], [0], [0], [1], [0, 0, 1, 1], [], []>} : vector<2x48xbf16>, vector<48x32xbf16>, vector<2x32xf32> -> vector<2x32xf32>
      %c0_48 = arith.constant 0 : index
      %c0_49 = arith.constant 0 : index
      %55 = vector.load %arg16[%c0_48, %c0_49] : memref<1x32xf32, #tpu.memory_space<vmem>>, vector<1x32xf32>
      %56 = vector.broadcast %55 : vector<1x32xf32> to vector<2x32xf32>
      %57 = arith.addf %54, %56 : vector<2x32xf32>
      %58 = arith.truncf %45 : vector<2x64xf32> to vector<2x64xbf16>
      %c0_50 = arith.constant 0 : index
      %c0_51 = arith.constant 0 : index
      %59 = vector.load %arg17[%c0_50, %c0_51] : memref<64x32xbf16, #tpu.memory_space<vmem>>, vector<64x32xbf16>
      %cst_52 = arith.constant dense<0.000000e+00> : vector<2x32xf32>
      %60 = tpu.matmul %58, %59, %cst_52 {dimension_numbers = #tpu.dot_dimension_numbers<[1], [0], [0], [1], [0, 0, 1, 1], [], []>} : vector<2x64xbf16>, vector<64x32xbf16>, vector<2x32xf32> -> vector<2x32xf32>
      %c0_53 = arith.constant 0 : index
      %c0_54 = arith.constant 0 : index
      %61 = vector.load %arg18[%c0_53, %c0_54] : memref<1x32xf32, #tpu.memory_space<vmem>>, vector<1x32xf32>
      %62 = vector.broadcast %61 : vector<1x32xf32> to vector<2x32xf32>
      %63 = arith.addf %60, %62 : vector<2x32xf32>
      %64 = tpu.concatenate %51, %57, %63 in 1 : vector<2x32xf32>, vector<2x32xf32>, vector<2x32xf32> -> vector<2x96xf32>
      %c0_55 = arith.constant 0 : index
      %c0_56 = arith.constant 0 : index
      %65 = vector.load %arg19[%c0_55, %c0_56] : memref<2x96xf32, #tpu.memory_space<vmem>>, vector<2x96xf32>
      tpu.vector_store %arg19[%c0_55, %c0_56], %64 {strides = array<i32>} : memref<2x96xf32, #tpu.memory_space<vmem>>, vector<2x96xf32>,
    } else {
    }
    return
  }
  func.func @transform_0(%arg0: i32, %arg1: i32) -> (i32, i32) {
    %c0_i32 = arith.constant 0 : i32
    return %arg0, %arg1 : i32, i32
  }
  func.func @transform_1(%arg0: i32, %arg1: i32) -> (i32, i32, i32) {
    %c0_i32 = arith.constant 0 : i32
    %c0_i32_0 = arith.constant 0 : i32
    %c0_i32_1 = arith.constant 0 : i32
    return %arg0, %c0_i32, %c0_i32_0 : i32, i32, i32
  }
  func.func @transform_2(%arg0: i32, %arg1: i32) -> (i32, i32, i32) {
    %c0_i32 = arith.constant 0 : i32
    %c0_i32_0 = arith.constant 0 : i32
    %c0_i32_1 = arith.constant 0 : i32
    return %arg0, %c0_i32, %c0_i32_0 : i32, i32, i32
  }
  func.func @transform_3(%arg0: i32, %arg1: i32) -> (i32, i32) {
    %c0_i32 = arith.constant 0 : i32
    %c0_i32_0 = arith.constant 0 : i32
    %c0_i32_1 = arith.constant 0 : i32
    return %c0_i32, %c0_i32_0 : i32, i32
  }
  func.func @transform_4(%arg0: i32, %arg1: i32) -> (i32, i32) {
    %c0_i32 = arith.constant 0 : i32
    %c0_i32_0 = arith.constant 0 : i32
    %c0_i32_1 = arith.constant 0 : i32
    return %c0_i32, %c0_i32_0 : i32, i32
  }
  func.func @transform_5(%arg0: i32, %arg1: i32) -> (i32, i32) {
    %c0_i32 = arith.constant 0 : i32
    %c0_i32_0 = arith.constant 0 : i32
    %c0_i32_1 = arith.constant 0 : i32
    return %c0_i32, %c0_i32_0 : i32, i32
  }
  func.func @transform_6(%arg0: i32, %arg1: i32) -> (i32, i32) {
    %c0_i32 = arith.constant 0 : i32
    %c0_i32_0 = arith.constant 0 : i32
    %c0_i32_1 = arith.constant 0 : i32
    return %c0_i32, %c0_i32_0 : i32, i32
  }
  func.func @transform_7(%arg0: i32, %arg1: i32) -> (i32, i32) {
    %c0_i32 = arith.constant 0 : i32
    %c0_i32_0 = arith.constant 0 : i32
    %c0_i32_1 = arith.constant 0 : i32
    return %c0_i32, %c0_i32_0 : i32, i32
  }
  func.func @transform_8(%arg0: i32, %arg1: i32) -> (i32, i32) {
    %c0_i32 = arith.constant 0 : i32
    %c0_i32_0 = arith.constant 0 : i32
    %c0_i32_1 = arith.constant 0 : i32
    return %c0_i32, %c0_i32_0 : i32, i32
  }
  func.func @transform_9(%arg0: i32, %arg1: i32) -> (i32, i32) {
    %c0_i32 = arith.constant 0 : i32
    %c0_i32_0 = arith.constant 0 : i32
    %c0_i32_1 = arith.constant 0 : i32
    return %c0_i32, %c0_i32_0 : i32, i32
  }
  func.func @transform_10(%arg0: i32, %arg1: i32) -> (i32, i32) {
    %c0_i32 = arith.constant 0 : i32
    %c0_i32_0 = arith.constant 0 : i32
    %c0_i32_1 = arith.constant 0 : i32
    return %c0_i32, %c0_i32_0 : i32, i32
  }
  func.func @transform_11(%arg0: i32, %arg1: i32) -> (i32, i32) {
    %c0_i32 = arith.constant 0 : i32
    %c0_i32_0 = arith.constant 0 : i32
    %c0_i32_1 = arith.constant 0 : i32
    return %c0_i32, %c0_i32_0 : i32, i32
  }
  func.func @transform_12(%arg0: i32, %arg1: i32) -> (i32, i32) {
    %c0_i32 = arith.constant 0 : i32
    %c0_i32_0 = arith.constant 0 : i32
    %c0_i32_1 = arith.constant 0 : i32
    return %c0_i32, %c0_i32_0 : i32, i32
  }
  func.func @transform_13(%arg0: i32, %arg1: i32) -> (i32, i32) {
    %c0_i32 = arith.constant 0 : i32
    %c0_i32_0 = arith.constant 0 : i32
    %c0_i32_1 = arith.constant 0 : i32
    return %c0_i32, %c0_i32_0 : i32, i32
  }
  func.func @transform_14(%arg0: i32, %arg1: i32) -> (i32, i32) {
    %c0_i32 = arith.constant 0 : i32
    %c0_i32_0 = arith.constant 0 : i32
    %c0_i32_1 = arith.constant 0 : i32
    return %c0_i32, %c0_i32_0 : i32, i32
  }
  func.func @transform_15(%arg0: i32, %arg1: i32) -> (i32, i32) {
    %c0_i32 = arith.constant 0 : i32
    %c0_i32_0 = arith.constant 0 : i32
    %c0_i32_1 = arith.constant 0 : i32
    return %c0_i32, %c0_i32_0 : i32, i32
  }
  func.func @transform_16(%arg0: i32, %arg1: i32) -> (i32, i32) {
    %c0_i32 = arith.constant 0 : i32
    %c0_i32_0 = arith.constant 0 : i32
    %c0_i32_1 = arith.constant 0 : i32
    return %c0_i32, %c0_i32_0 : i32, i32
  }
  func.func @transform_17(%arg0: i32, %arg1: i32) -> (i32, i32) {
    %c0_i32 = arith.constant 0 : i32
    %c0_i32_0 = arith.constant 0 : i32
    return %arg0, %c0_i32 : i32, i32
  }
}

</mosaic_0001>

<llo_original>
// kernel: contrastive_forward.3
$region0: #{contrastive_forward.3}
  #allocation0 [shape = 'u32[]', space=smem, size = 0x4, offset = 0x4, fixed_abs, tag = 'smem constant byte address 0x4 - core index']
  #allocation1 [shape = 'u32[144,128]{1,0:T(1,128)}', space=vmem, size = 0x12000, scoped, tag = 'internal scratch']
  %s0 = inlined_call_operand.vmem [shape: f32[2,96], index: 0, kind: input, shape index: {}, may-alias: {0,1}]
  %s1 = inlined_call_operand.vmem [shape: f32[2,96], index: 1, kind: input, shape index: {}, may-alias: {0,1}]
  %s2 = inlined_call_operand.vmem [shape: f32[2,6], index: 2, kind: output, shape index: {}]
  %s3 = sld [smem:[#allocation0]]
  $region18: #{contrastive_forward.3} parent=0
    _
  %s5 = ssub.s32 1, %s3
  %s6 = scalar_select 0, %s5, %s3
  // Predicated region
  $region2: #{contrastive_forward.3} parent=0 // pred_check
    _
  $region3: #{contrastive_forward.3} parent=0 // pred_check_branch
    %8 = sbr.rel (0) target = $region5
  $region4: #{contrastive_forward.3} parent=0 // pred_region
    _
  $region5: #{contrastive_forward.3} parent=0 // pred_fallthru
    _
  // Predicated region
  $region6: #{contrastive_forward.3} parent=0 // pred_check
    _
  $region7: #{contrastive_forward.3} parent=0 // pred_check_branch
    %10 = sbr.rel (0) target = $region9
  $region8: #{contrastive_forward.3} parent=0 // pred_region
    _
  $region9: #{contrastive_forward.3} parent=0 // pred_fallthru
    _
  %v11 = vld [vmem:[%s0] sm:$0x3]
  %v12 = vld [vmem:[%s1] sm:$0x3]
  %14 = vrot.lane.b32.xlu0 %v12, 96
  %v15 = vpop.permute.xlu0 %14
  %vm16 = vcmask 261120
  %v18 = vsel %vm16, %v11, 0
  %v20 = vsel %vm16, %v15, 0
  %22 = vmatprep.subr.mxu0 0.0
  %23 = vmatpush1.xpose.msra.mxu0 0.0
  %24 = vmatprep.subr.mxu0 0.0
  %25 = vmatpush1.xpose.msra.mxu0 0.0
  %26 = vmatprep.subr.mxu0 0.0
  %27 = vmatpush1.xpose.msra.mxu0 0.0
  %28 = vmatprep.subr.mxu0 0.0
  %29 = vmatpush1.xpose.msra.mxu0 0.0
  %30 = vmatprep.subr.mxu0 0.0
  %31 = vmatpush1.xpose.msra.mxu0 0.0
  %32 = vmatprep.subr.mxu0 0.0
  %33 = vmatpush1.xpose.msra.mxu0 0.0
  %34 = vmatprep.subr.mxu0 0.0
  %35 = vmatpush1.xpose.msra.mxu0 0.0
  %36 = vmatprep.subr.mxu0 0.0
  %37 = vmatpush1.xpose.msra.mxu0 0.0
  %38 = vmatprep.subr.mxu0 0.0
  %39 = vmatpush1.xpose.msra.mxu0 0.0
  %40 = vmatprep.subr.mxu0 0.0
  %41 = vmatpush1.xpose.msra.mxu0 0.0
  %42 = vmatprep.subr.mxu0 0.0
  %43 = vmatpush1.xpose.msra.mxu0 0.0
  %44 = vmatprep.subr.mxu0 0.0
  %45 = vmatpush1.xpose.msra.mxu0 0.0
  %46 = vmatprep.subr.mxu0 0.0
  %47 = vmatpush1.xpose.msra.mxu0 0.0
  %48 = vmatprep.subr.mxu0 0.0
  %49 = vmatpush1.xpose.msra.mxu0 0.0
  %50 = vmatprep.subr.mxu0 0.0
  %51 = vmatpush1.xpose.msra.mxu0 0.0
  %52 = vmatprep.subr.mxu0 0.0
  %53 = vmatpush1.xpose.msra.mxu0 %v20
  %54 = vmatprep.subr.mxu0 0.0
  %55 = vmatpush2.xpose.msra.mxu0 0.0
  %56 = vmatprep.subr.mxu0 0.0
  %57 = vmatpush2.xpose.msra.mxu0 0.0
  %58 = vmatprep.subr.mxu0 0.0
  %59 = vmatpush2.xpose.msra.mxu0 0.0
  %60 = vmatprep.subr.mxu0 0.0
  %61 = vmatpush2.xpose.msra.mxu0 0.0
  %62 = vmatprep.subr.mxu0 0.0
  %63 = vmatpush2.xpose.msra.mxu0 0.0
  %64 = vmatprep.subr.mxu0 0.0
  %65 = vmatpush2.xpose.msra.mxu0 0.0
  %66 = vmatprep.subr.mxu0 0.0
  %67 = vmatpush2.xpose.msra.mxu0 0.0
  %68 = vmatprep.subr.mxu0 0.0
  %69 = vmatpush2.xpose.msra.mxu0 0.0
  %70 = vmatprep.subr.mxu0 0.0
  %71 = vmatpush2.xpose.msra.mxu0 0.0
  %72 = vmatprep.subr.mxu0 0.0
  %73 = vmatpush2.xpose.msra.mxu0 0.0
  %74 = vmatprep.subr.mxu0 0.0
  %75 = vmatpush2.xpose.msra.mxu0 0.0
  %76 = vmatprep.subr.mxu0 0.0
  %77 = vmatpush2.xpose.msra.mxu0 0.0
  %78 = vmatprep.subr.mxu0 0.0
  %79 = vmatpush2.xpose.msra.mxu0 0.0
  %80 = vmatprep.subr.mxu0 0.0
  %81 = vmatpush2.xpose.msra.mxu0 0.0
  %82 = vmatprep.subr.mxu0 0.0
  %83 = vmatpush2.xpose.msra.mxu0 0.0
  %84 = vmatprep.subr.mxu0 0.0
  %85 = vmatpush2.xpose.msra.mxu0 0.0
  %86 = vmatprep.mubr.f32.mxu0 0.0
  %87 = vmatmul.mubr.f32.gmra.mxu0 %v18
  %v88 = vpop.f32.mrf.mxu0
  %v89 = vadd.f32 0.0, %v88
  %v90 = vpop.f32.mrf.mxu0
  %91 = vdwg.mxu0
  %92 = vrot.lane.b32.xlu0 %v12, 64
  %v93 = vpop.permute.xlu0 %92
  %v94 = vsel %vm16, %v93, 0
  %96 = vmatprep.subr.mxu0 0.0
  %97 = vmatpush1.xpose.msra.mxu0 0.0
  %98 = vmatprep.subr.mxu0 0.0
  %99 = vmatpush1.xpose.msra.mxu0 0.0
  %100 = vmatprep.subr.mxu0 0.0
  %101 = vmatpush1.xpose.msra.mxu0 0.0
  %102 = vmatprep.subr.mxu0 0.0
  %103 = vmatpush1.xpose.msra.mxu0 0.0
  %104 = vmatprep.subr.mxu0 0.0
  %105 = vmatpush1.xpose.msra.mxu0 0.0
  %106 = vmatprep.subr.mxu0 0.0
  %107 = vmatpush1.xpose.msra.mxu0 0.0
  %108 = vmatprep.subr.mxu0 0.0
  %109 = vmatpush1.xpose.msra.mxu0 0.0
  %110 = vmatprep.subr.mxu0 0.0
  %111 = vmatpush1.xpose.msra.mxu0 0.0
  %112 = vmatprep.subr.mxu0 0.0
  %113 = vmatpush1.xpose.msra.mxu0 0.0
  %114 = vmatprep.subr.mxu0 0.0
  %115 = vmatpush1.xpose.msra.mxu0 0.0
  %116 = vmatprep.subr.mxu0 0.0
  %117 = vmatpush1.xpose.msra.mxu0 0.0
  %118 = vmatprep.subr.mxu0 0.0
  %119 = vmatpush1.xpose.msra.mxu0 0.0
  %120 = vmatprep.subr.mxu0 0.0
  %121 = vmatpush1.xpose.msra.mxu0 0.0
  %122 = vmatprep.subr.mxu0 0.0
  %123 = vmatpush1.xpose.msra.mxu0 0.0
  %124 = vmatprep.subr.mxu0 0.0
  %125 = vmatpush1.xpose.msra.mxu0 0.0
  %126 = vmatprep.subr.mxu0 0.0
  %127 = vmatpush1.xpose.msra.mxu0 %v94
  %128 = vmatprep.subr.mxu0 0.0
  %129 = vmatpush2.xpose.msra.mxu0 0.0
  %130 = vmatprep.subr.mxu0 0.0
  %131 = vmatpush2.xpose.msra.mxu0 0.0
  %132 = vmatprep.subr.mxu0 0.0
  %133 = vmatpush2.xpose.msra.mxu0 0.0
  %134 = vmatprep.subr.mxu0 0.0
  %135 = vmatpush2.xpose.msra.mxu0 0.0
  %136 = vmatprep.subr.mxu0 0.0
  %137 = vmatpush2.xpose.msra.mxu0 0.0
  %138 = vmatprep.subr.mxu0 0.0
  %139 = vmatpush2.xpose.msra.mxu0 0.0
  %140 = vmatprep.subr.mxu0 0.0
  %141 = vmatpush2.xpose.msra.mxu0 0.0
  %142 = vmatprep.subr.mxu0 0.0
  %143 = vmatpush2.xpose.msra.mxu0 0.0
  %144 = vmatprep.subr.mxu0 0.0
  %145 = vmatpush2.xpose.msra.mxu0 0.0
  %146 = vmatprep.subr.mxu0 0.0
  %147 = vmatpush2.xpose.msra.mxu0 0.0
  %148 = vmatprep.subr.mxu0 0.0
  %149 = vmatpush2.xpose.msra.mxu0 0.0
  %150 = vmatprep.subr.mxu0 0.0
  %151 = vmatpush2.xpose.msra.mxu0 0.0
  %152 = vmatprep.subr.mxu0 0.0
  %153 = vmatpush2.xpose.msra.mxu0 0.0
  %154 = vmatprep.subr.mxu0 0.0
  %155 = vmatpush2.xpose.msra.mxu0 0.0
  %156 = vmatprep.subr.mxu0 0.0
  %157 = vmatpush2.xpose.msra.mxu0 0.0
  %158 = vmatprep.subr.mxu0 0.0
  %159 = vmatpush2.xpose.msra.mxu0 0.0
  %160 = vmatprep.mubr.f32.mxu0 0.0
  %161 = vmatmul.mubr.f32.gmra.mxu0 %v18
  %v162 = vpop.f32.mrf.mxu0
  %v163 = vadd.f32 0.0, %v162
  %v164 = vpop.f32.mrf.mxu0
  %165 = vdwg.mxu0
  %166 = vrot.lane.b32.xlu0 %v11, 96
  %v167 = vpop.permute.xlu0 %166
  %v168 = vsel %vm16, %v167, 0
  %170 = vmatprep.subr.mxu0 0.0
  %171 = vmatpush1.xpose.msra.mxu0 0.0
  %172 = vmatprep.subr.mxu0 0.0
  %173 = vmatpush1.xpose.msra.mxu0 0.0
  %174 = vmatprep.subr.mxu0 0.0
  %175 = vmatpush1.xpose.msra.mxu0 0.0
  %176 = vmatprep.subr.mxu0 0.0
  %177 = vmatpush1.xpose.msra.mxu0 0.0
  %178 = vmatprep.subr.mxu0 0.0
  %179 = vmatpush1.xpose.msra.mxu0 0.0
  %180 = vmatprep.subr.mxu0 0.0
  %181 = vmatpush1.xpose.msra.mxu0 0.0
  %182 = vmatprep.subr.mxu0 0.0
  %183 = vmatpush1.xpose.msra.mxu0 0.0
  %184 = vmatprep.subr.mxu0 0.0
  %185 = vmatpush1.xpose.msra.mxu0 0.0
  %186 = vmatprep.subr.mxu0 0.0
  %187 = vmatpush1.xpose.msra.mxu0 0.0
  %188 = vmatprep.subr.mxu0 0.0
  %189 = vmatpush1.xpose.msra.mxu0 0.0
  %190 = vmatprep.subr.mxu0 0.0
  %191 = vmatpush1.xpose.msra.mxu0 0.0
  %192 = vmatprep.subr.mxu0 0.0
  %193 = vmatpush1.xpose.msra.mxu0 0.0
  %194 = vmatprep.subr.mxu0 0.0
  %195 = vmatpush1.xpose.msra.mxu0 0.0
  %196 = vmatprep.subr.mxu0 0.0
  %197 = vmatpush1.xpose.msra.mxu0 0.0
  %198 = vmatprep.subr.mxu0 0.0
  %199 = vmatpush1.xpose.msra.mxu0 0.0
  %200 = vmatprep.subr.mxu0 0.0
  %201 = vmatpush1.xpose.msra.mxu0 %v94
  %202 = vmatprep.subr.mxu0 0.0
  %203 = vmatpush2.xpose.msra.mxu0 0.0
  %204 = vmatprep.subr.mxu0 0.0
  %205 = vmatpush2.xpose.msra.mxu0 0.0
  %206 = vmatprep.subr.mxu0 0.0
  %207 = vmatpush2.xpose.msra.mxu0 0.0
  %208 = vmatprep.subr.mxu0 0.0
  %209 = vmatpush2.xpose.msra.mxu0 0.0
  %210 = vmatprep.subr.mxu0 0.0
  %211 = vmatpush2.xpose.msra.mxu0 0.0
  %212 = vmatprep.subr.mxu0 0.0
  %213 = vmatpush2.xpose.msra.mxu0 0.0
  %214 = vmatprep.subr.mxu0 0.0
  %215 = vmatpush2.xpose.msra.mxu0 0.0
  %216 = vmatprep.subr.mxu0 0.0
  %217 = vmatpush2.xpose.msra.mxu0 0.0
  %218 = vmatprep.subr.mxu0 0.0
  %219 = vmatpush2.xpose.msra.mxu0 0.0
  %220 = vmatprep.subr.mxu0 0.0
  %221 = vmatpush2.xpose.msra.mxu0 0.0
  %222 = vmatprep.subr.mxu0 0.0
  %223 = vmatpush2.xpose.msra.mxu0 0.0
  %224 = vmatprep.subr.mxu0 0.0
  %225 = vmatpush2.xpose.msra.mxu0 0.0
  %226 = vmatprep.subr.mxu0 0.0
  %227 = vmatpush2.xpose.msra.mxu0 0.0
  %228 = vmatprep.subr.mxu0 0.0
  %229 = vmatpush2.xpose.msra.mxu0 0.0
  %230 = vmatprep.subr.mxu0 0.0
  %231 = vmatpush2.xpose.msra.mxu0 0.0
  %232 = vmatprep.subr.mxu0 0.0
  %233 = vmatpush2.xpose.msra.mxu0 0.0
  %234 = vmatprep.mubr.f32.mxu0 0.0
  %235 = vmatmul.mubr.f32.gmra.mxu0 %v168
  %v236 = vpop.f32.mrf.mxu0
  %v237 = vadd.f32 0.0, %v236
  %v238 = vpop.f32.mrf.mxu0
  %239 = vdwg.mxu0
  %241 = vrot.lane.b32.xlu0 %v163, 2
  %v242 = vpop.permute.xlu0 %241
  %245 = vrot.lane.b32.xlu0 %v237, 4
  %v246 = vpop.permute.xlu0 %245
  %vm248 = vcmask 15360
  %v249 = vsel %vm248, %v89, %v242
  %vm250 = vcmask 31744
  %v251 = vsel %vm250, %v249, %v246
  %vm252 = vcmask 41984
  %253 = vst.msk [vmem:[%s2] sm:$0x3] %vm252, %v251
  // Predicated region
  $region10: #{contrastive_forward.3} parent=0 // pred_check
    _
  $region11: #{contrastive_forward.3} parent=0 // pred_check_branch
    %255 = sbr.rel (0) target = $region13
  $region12: #{contrastive_forward.3} parent=0 // pred_region
    _
  $region13: #{contrastive_forward.3} parent=0 // pred_fallthru
    _
  // Predicated region
  $region14: #{contrastive_forward.3} parent=0 // pred_check
    _
  $region15: #{contrastive_forward.3} parent=0 // pred_check_branch
    %257 = sbr.rel (0) target = $region17
  $region16: #{contrastive_forward.3} parent=0 // pred_region
    _
  $region17: #{contrastive_forward.3} parent=0 // pred_fallthru
    _

// kernel: contrastive_forward.2
$region0: #{contrastive_forward.2}
  #allocation0 [shape = 'u32[]', space=smem, size = 0x4, offset = 0x4, fixed_abs, tag = 'smem constant byte address 0x4 - core index']
  #allocation1 [shape = 'u32[144,128]{1,0:T(1,128)}', space=vmem, size = 0x12000, scoped, tag = 'internal scratch']
  #allocation2 [shape = 'f32[8,1]{1,0:T(8,128)}', space=vmem, size = 0x1000, scoped, tag = 'scratch operand']
  %s0 = inlined_call_operand.vmem [shape: f32[8,256], index: 0, kind: input, shape index: {}]
  %s1 = inlined_call_operand.vmem [shape: f32[2,8,32], index: 1, kind: input, shape index: {}]
  %s2 = inlined_call_operand.vmem [shape: f32[2,8,32], index: 2, kind: input, shape index: {}]
  %s3 = inlined_call_operand.vmem [shape: f32[8,4], index: 3, kind: input, shape index: {}]
  %s4 = inlined_call_operand.vmem [shape: f32[2,8], index: 4, kind: input, shape index: {}]
  %s5 = inlined_call_operand.vmem [shape: bf16[4,32], index: 5, kind: input, shape index: {}]
  %s6 = inlined_call_operand.vmem [shape: f32[1,32], index: 6, kind: input, shape index: {}]
  %s7 = inlined_call_operand.vmem [shape: bf16[32,48], index: 7, kind: input, shape index: {}]
  %s8 = inlined_call_operand.vmem [shape: f32[1,48], index: 8, kind: input, shape index: {}]
  %s9 = inlined_call_operand.vmem [shape: bf16[32,64], index: 9, kind: input, shape index: {}]
  %s10 = inlined_call_operand.vmem [shape: f32[1,64], index: 10, kind: input, shape index: {}]
  %s11 = inlined_call_operand.vmem [shape: bf16[32,32], index: 11, kind: input, shape index: {}]
  %s12 = inlined_call_operand.vmem [shape: f32[1,32], index: 12, kind: input, shape index: {}]
  %s13 = inlined_call_operand.vmem [shape: bf16[48,32], index: 13, kind: input, shape index: {}]
  %s14 = inlined_call_operand.vmem [shape: f32[1,32], index: 14, kind: input, shape index: {}]
  %s15 = inlined_call_operand.vmem [shape: bf16[64,32], index: 15, kind: input, shape index: {}]
  %s16 = inlined_call_operand.vmem [shape: f32[1,32], index: 16, kind: input, shape index: {}]
  %s17 = inlined_call_operand.vmem [shape: f32[2,96], index: 17, kind: output, shape index: {}]
  %s18 = sld [smem:[#allocation0]]
  $region109: #{contrastive_forward.2} parent=0
    _
  %s20 = ssub.s32 1, %s18
  %s21 = scalar_select 0, %s20, %s18
  loop: start=0, step=1, limit=4
  $region2: #{contrastive_forward.2} parent=0 // loop_pre_header
    _
  $region3: #{contrastive_forward.2} parent=0 // loop_header
    %s23 = sphi 0, %s27
    %p24 = scmp.ge.s32.totalorder %s23, 4
    %s30 = sphi 0, %s42
    %s31 = sphi 0, %s38
    %s32 = sphi 0, %s30
    %s33 = sphi 0, %s31
    %s34 = sphi 0, %s32
    %s35 = sphi 0, %s33
    %s47 = sphi 0, %s49
    %s50 = sphi 0, %s47
    %s51 = sphi 0, %s50
    %s67 = sphi 0, %s51
    %s73 = sphi 0, %s75
    %s76 = sphi 0, %s73
    %s77 = sphi 0, %s76
    %s93 = sphi 0, %s77
    %s99 = sphi 0, %s101
    %s102 = sphi 0, %s99
    %s103 = sphi 0, %s102
    %s119 = sphi 0, %s103
    %s123 = sphi 0, %s123
    %s125 = sphi 0, %s123
    %s126 = sphi 0, %s125
    %s140 = sphi 0, %s126
    %s144 = sphi 0, %s144
    %s146 = sphi 0, %s144
    %s147 = sphi 0, %s146
    %s161 = sphi 0, %s147
    %s165 = sphi 0, %s165
    %s167 = sphi 0, %s165
    %s168 = sphi 0, %s167
    %s182 = sphi 0, %s168
    %s186 = sphi 0, %s186
    %s188 = sphi 0, %s186
    %s189 = sphi 0, %s188
    %s203 = sphi 0, %s189
    %s207 = sphi 0, %s207
    %s209 = sphi 0, %s207
    %s210 = sphi 0, %s209
    %s224 = sphi 0, %s210
    %s228 = sphi 0, %s228
    %s230 = sphi 0, %s228
    %s231 = sphi 0, %s230
    %s245 = sphi 0, %s231
    %s249 = sphi 0, %s249
    %s251 = sphi 0, %s249
    %s252 = sphi 0, %s251
    %s266 = sphi 0, %s252
    %s270 = sphi 0, %s270
    %s272 = sphi 0, %s270
    %s273 = sphi 0, %s272
    %s287 = sphi 0, %s273
    %s291 = sphi 0, %s291
    %s293 = sphi 0, %s291
    %s294 = sphi 0, %s293
    %s308 = sphi 0, %s294
    %s312 = sphi 0, %s312
    %s314 = sphi 0, %s312
    %s315 = sphi 0, %s314
    %s329 = sphi 0, %s315
    %s333 = sphi 0, %s333
    %s335 = sphi 0, %s333
    %s336 = sphi 0, %s335
    %s350 = sphi 0, %s336
    %s354 = sphi 0, %s354
    %s356 = sphi 0, %s354
    %s357 = sphi 0, %s356
    %s371 = sphi 0, %s357
    %s375 = sphi 0, %s375
    %s377 = sphi 0, %s375
    %s378 = sphi 0, %s377
    %s392 = sphi 0, %s378
    %s396 = sphi 0, %s396
    %s398 = sphi 0, %s396
    %s399 = sphi 0, %s398
    %s413 = sphi 0, %s399
    %s419 = sphi 0, %s421
    %s422 = sphi 0, %s419
    %s423 = sphi 0, %s422
    %s439 = sphi 0, %s423
  $region4: #{contrastive_forward.2} parent=0 // loop_header_branch
    %26 = sbr.rel (%p24) target = $region8
  $region5: #{contrastive_forward.2} parent=0 // loop_body
    %s28 = ssub.s32 %s23, 1
    %s29 = ssub.s32 %s23, 2
    %s36 = sadd.s32 1, %s31
    %p37 = scmp.ge.s32.totalorder %s36, 2
    %s38 = scalar_select %p37, 0, %s36
    %s39 = sadd.s32 1, %s30
    %s40 = scalar_select %p37, %s39, %s30
    %p41 = scmp.ge.s32.totalorder %s40, 1
    %s42 = scalar_select %p41, 0, %s40
    %s43 = ssub.s32 %s30, %s42
    %s44 = ssub.s32 %s31, %s38
    %s45 = sor.u32 %s43, %s44
    %p46 = scmp.eq.s32.totalorder %s45, 0
    %s48 = sadd.s32 %s47, 1
    %s49 = scalar_select %p46, %s47, %s48
    %p52 = pneg %p46
    %p53 = scmp.eq.s32.totalorder %s23, 1
    %p54 = por %p52, %p53
    %p55 = scmp.ne.s32.totalorder %s47, %s50
    %p56 = scmp.eq.s32.totalorder %s23, 0
    %p57 = por %p55, %p56
    %p58 = scmp.ne.s32.totalorder %s47, %s50
    %p59 = scmp.eq.s32.totalorder %s28, 1
    %p60 = por %p58, %p59
    %p61 = scmp.ne.s32.totalorder %s50, %s51
    %p62 = scmp.eq.s32.totalorder %s28, 0
    %p63 = por %p61, %p62
    %p64 = scmp.ne.s32.totalorder %s50, %s51
    %p65 = scmp.eq.s32.totalorder %s29, 1
    %p66 = por %p64, %p65
    %p68 = scmp.ne.s32.totalorder %s51, %s67
    %p69 = scmp.eq.s32.totalorder %s29, 0
    %p70 = por %p68, %p69
    %s71 = ssub.s32 %s30, %s42
    %p72 = scmp.eq.s32.totalorder %s71, 0
    %s74 = sadd.s32 %s73, 1
    %s75 = scalar_select %p72, %s73, %s74
    %p78 = pneg %p72
    %p79 = scmp.eq.s32.totalorder %s23, 1
    %p80 = por %p78, %p79
    %p81 = scmp.ne.s32.totalorder %s73, %s76
    %p82 = scmp.eq.s32.totalorder %s23, 0
    %p83 = por %p81, %p82
    %p84 = scmp.ne.s32.totalorder %s73, %s76
    %p85 = scmp.eq.s32.totalorder %s28, 1
    %p86 = por %p84, %p85
    %p87 = scmp.ne.s32.totalorder %s76, %s77
    %p88 = scmp.eq.s32.totalorder %s28, 0
    %p89 = por %p87, %p88
    %p90 = scmp.ne.s32.totalorder %s76, %s77
    %p91 = scmp.eq.s32.totalorder %s29, 1
    %p92 = por %p90, %p91
    %p94 = scmp.ne.s32.totalorder %s77, %s93
    %p95 = scmp.eq.s32.totalorder %s29, 0
    %p96 = por %p94, %p95
    %s97 = ssub.s32 %s30, %s42
    %p98 = scmp.eq.s32.totalorder %s97, 0
    %s100 = sadd.s32 %s99, 1
    %s101 = scalar_select %p98, %s99, %s100
    %p104 = pneg %p98
    %p105 = scmp.eq.s32.totalorder %s23, 1
    %p106 = por %p104, %p105
    %p107 = scmp.ne.s32.totalorder %s99, %s102
    %p108 = scmp.eq.s32.totalorder %s23, 0
    %p109 = por %p107, %p108
    %p110 = scmp.ne.s32.totalorder %s99, %s102
    %p111 = scmp.eq.s32.totalorder %s28, 1
    %p112 = por %p110, %p111
    %p113 = scmp.ne.s32.totalorder %s102, %s103
    %p114 = scmp.eq.s32.totalorder %s28, 0
    %p115 = por %p113, %p114
    %p116 = scmp.ne.s32.totalorder %s102, %s103
    %p117 = scmp.eq.s32.totalorder %s29, 1
    %p118 = por %p116, %p117
    %p120 = scmp.ne.s32.totalorder %s103, %s119
    %p121 = scmp.eq.s32.totalorder %s29, 0
    %p122 = por %p120, %p121
    %s124 = sadd.s32 %s123, 1
    %p127 = scmp.eq.s32.totalorder %s23, 1
    %p128 = scmp.ne.s32.totalorder %s123, %s125
    %p129 = scmp.eq.s32.totalorder %s23, 0
    %p130 = por %p128, %p129
    %p131 = scmp.ne.s32.totalorder %s123, %s125
    %p132 = scmp.eq.s32.totalorder %s28, 1
    %p133 = por %p131, %p132
    %p134 = scmp.ne.s32.totalorder %s125, %s126
    %p135 = scmp.eq.s32.totalorder %s28, 0
    %p136 = por %p134, %p135
    %p137 = scmp.ne.s32.totalorder %s125, %s126
    %p138 = scmp.eq.s32.totalorder %s29, 1
    %p139 = por %p137, %p138
    %p141 = scmp.ne.s32.totalorder %s126, %s140
    %p142 = scmp.eq.s32.totalorder %s29, 0
    %p143 = por %p141, %p142
    %s145 = sadd.s32 %s144, 1
    %p148 = scmp.eq.s32.totalorder %s23, 1
    %p149 = scmp.ne.s32.totalorder %s144, %s146
    %p150 = scmp.eq.s32.totalorder %s23, 0
    %p151 = por %p149, %p150
    %p152 = scmp.ne.s32.totalorder %s144, %s146
    %p153 = scmp.eq.s32.totalorder %s28, 1
    %p154 = por %p152, %p153
    %p155 = scmp.ne.s32.totalorder %s146, %s147
    %p156 = scmp.eq.s32.totalorder %s28, 0
    %p157 = por %p155, %p156
    %p158 = scmp.ne.s32.totalorder %s146, %s147
    %p159 = scmp.eq.s32.totalorder %s29, 1
    %p160 = por %p158, %p159
    %p162 = scmp.ne.s32.totalorder %s147, %s161
    %p163 = scmp.eq.s32.totalorder %s29, 0
    %p164 = por %p162, %p163
    %s166 = sadd.s32 %s165, 1
    %p169 = scmp.eq.s32.totalorder %s23, 1
    %p170 = scmp.ne.s32.totalorder %s165, %s167
    %p171 = scmp.eq.s32.totalorder %s23, 0
    %p172 = por %p170, %p171
    %p173 = scmp.ne.s32.totalorder %s165, %s167
    %p174 = scmp.eq.s32.totalorder %s28, 1
    %p175 = por %p173, %p174
    %p176 = scmp.ne.s32.totalorder %s167, %s168
    %p177 = scmp.eq.s32.totalorder %s28, 0
    %p178 = por %p176, %p177
    %p179 = scmp.ne.s32.totalorder %s167, %s168
    %p180 = scmp.eq.s32.totalorder %s29, 1
    %p181 = por %p179, %p180
    %p183 = scmp.ne.s32.totalorder %s168, %s182
    %p184 = scmp.eq.s32.totalorder %s29, 0
    %p185 = por %p183, %p184
    %s187 = sadd.s32 %s186, 1
    %p190 = scmp.eq.s32.totalorder %s23, 1
    %p191 = scmp.ne.s32.totalorder %s186, %s188
    %p192 = scmp.eq.s32.totalorder %s23, 0
    %p193 = por %p191, %p192
    %p194 = scmp.ne.s32.totalorder %s186, %s188
    %p195 = scmp.eq.s32.totalorder %s28, 1
    %p196 = por %p194, %p195
    %p197 = scmp.ne.s32.totalorder %s188, %s189
    %p198 = scmp.eq.s32.totalorder %s28, 0
    %p199 = por %p197, %p198
    %p200 = scmp.ne.s32.totalorder %s188, %s189
    %p201 = scmp.eq.s32.totalorder %s29, 1
    %p202 = por %p200, %p201
    %p204 = scmp.ne.s32.totalorder %s189, %s203
    %p205 = scmp.eq.s32.totalorder %s29, 0
    %p206 = por %p204, %p205
    %s208 = sadd.s32 %s207, 1
    %p211 = scmp.eq.s32.totalorder %s23, 1
    %p212 = scmp.ne.s32.totalorder %s207, %s209
    %p213 = scmp.eq.s32.totalorder %s23, 0
    %p214 = por %p212, %p213
    %p215 = scmp.ne.s32.totalorder %s207, %s209
    %p216 = scmp.eq.s32.totalorder %s28, 1
    %p217 = por %p215, %p216
    %p218 = scmp.ne.s32.totalorder %s209, %s210
    %p219 = scmp.eq.s32.totalorder %s28, 0
    %p220 = por %p218, %p219
    %p221 = scmp.ne.s32.totalorder %s209, %s210
    %p222 = scmp.eq.s32.totalorder %s29, 1
    %p223 = por %p221, %p222
    %p225 = scmp.ne.s32.totalorder %s210, %s224
    %p226 = scmp.eq.s32.totalorder %s29, 0
    %p227 = por %p225, %p226
    %s229 = sadd.s32 %s228, 1
    %p232 = scmp.eq.s32.totalorder %s23, 1
    %p233 = scmp.ne.s32.totalorder %s228, %s230
    %p234 = scmp.eq.s32.totalorder %s23, 0
    %p235 = por %p233, %p234
    %p236 = scmp.ne.s32.totalorder %s228, %s230
    %p237 = scmp.eq.s32.totalorder %s28, 1
    %p238 = por %p236, %p237
    %p239 = scmp.ne.s32.totalorder %s230, %s231
    %p240 = scmp.eq.s32.totalorder %s28, 0
    %p241 = por %p239, %p240
    %p242 = scmp.ne.s32.totalorder %s230, %s231
    %p243 = scmp.eq.s32.totalorder %s29, 1
    %p244 = por %p242, %p243
    %p246 = scmp.ne.s32.totalorder %s231, %s245
    %p247 = scmp.eq.s32.totalorder %s29, 0
    %p248 = por %p246, %p247
    %s250 = sadd.s32 %s249, 1
    %p253 = scmp.eq.s32.totalorder %s23, 1
    %p254 = scmp.ne.s32.totalorder %s249, %s251
    %p255 = scmp.eq.s32.totalorder %s23, 0
    %p256 = por %p254, %p255
    %p257 = scmp.ne.s32.totalorder %s249, %s251
    %p258 = scmp.eq.s32.totalorder %s28, 1
    %p259 = por %p257, %p258
    %p260 = scmp.ne.s32.totalorder %s251, %s252
    %p261 = scmp.eq.s32.totalorder %s28, 0
    %p262 = por %p260, %p261
    %p263 = scmp.ne.s32.totalorder %s251, %s252
    %p264 = scmp.eq.s32.totalorder %s29, 1
    %p265 = por %p263, %p264
    %p267 = scmp.ne.s32.totalorder %s252, %s266
    %p268 = scmp.eq.s32.totalorder %s29, 0
    %p269 = por %p267, %p268
    %s271 = sadd.s32 %s270, 1
    %p274 = scmp.eq.s32.totalorder %s23, 1
    %p275 = scmp.ne.s32.totalorder %s270, %s272
    %p276 = scmp.eq.s32.totalorder %s23, 0
    %p277 = por %p275, %p276
    %p278 = scmp.ne.s32.totalorder %s270, %s272
    %p279 = scmp.eq.s32.totalorder %s28, 1
    %p280 = por %p278, %p279
    %p281 = scmp.ne.s32.totalorder %s272, %s273
    %p282 = scmp.eq.s32.totalorder %s28, 0
    %p283 = por %p281, %p282
    %p284 = scmp.ne.s32.totalorder %s272, %s273
    %p285 = scmp.eq.s32.totalorder %s29, 1
    %p286 = por %p284, %p285
    %p288 = scmp.ne.s32.totalorder %s273, %s287
    %p289 = scmp.eq.s32.totalorder %s29, 0
    %p290 = por %p288, %p289
    %s292 = sadd.s32 %s291, 1
    %p295 = scmp.eq.s32.totalorder %s23, 1
    %p296 = scmp.ne.s32.totalorder %s291, %s293
    %p297 = scmp.eq.s32.totalorder %s23, 0
    %p298 = por %p296, %p297
    %p299 = scmp.ne.s32.totalorder %s291, %s293
    %p300 = scmp.eq.s32.totalorder %s28, 1
    %p301 = por %p299, %p300
    %p302 = scmp.ne.s32.totalorder %s293, %s294
    %p303 = scmp.eq.s32.totalorder %s28, 0
    %p304 = por %p302, %p303
    %p305 = scmp.ne.s32.totalorder %s293, %s294
    %p306 = scmp.eq.s32.totalorder %s29, 1
    %p307 = por %p305, %p306
    %p309 = scmp.ne.s32.totalorder %s294, %s308
    %p310 = scmp.eq.s32.totalorder %s29, 0
    %p311 = por %p309, %p310
    %s313 = sadd.s32 %s312, 1
    %p316 = scmp.eq.s32.totalorder %s23, 1
    %p317 = scmp.ne.s32.totalorder %s312, %s314
    %p318 = scmp.eq.s32.totalorder %s23, 0
    %p319 = por %p317, %p318
    %p320 = scmp.ne.s32.totalorder %s312, %s314
    %p321 = scmp.eq.s32.totalorder %s28, 1
    %p322 = por %p320, %p321
    %p323 = scmp.ne.s32.totalorder %s314, %s315
    %p324 = scmp.eq.s32.totalorder %s28, 0
    %p325 = por %p323, %p324
    %p326 = scmp.ne.s32.totalorder %s314, %s315
    %p327 = scmp.eq.s32.totalorder %s29, 1
    %p328 = por %p326, %p327
    %p330 = scmp.ne.s32.totalorder %s315, %s329
    %p331 = scmp.eq.s32.totalorder %s29, 0
    %p332 = por %p330, %p331
    %s334 = sadd.s32 %s333, 1
    %p337 = scmp.eq.s32.totalorder %s23, 1
    %p338 = scmp.ne.s32.totalorder %s333, %s335
    %p339 = scmp.eq.s32.totalorder %s23, 0
    %p340 = por %p338, %p339
    %p341 = scmp.ne.s32.totalorder %s333, %s335
    %p342 = scmp.eq.s32.totalorder %s28, 1
    %p343 = por %p341, %p342
    %p344 = scmp.ne.s32.totalorder %s335, %s336
    %p345 = scmp.eq.s32.totalorder %s28, 0
    %p346 = por %p344, %p345
    %p347 = scmp.ne.s32.totalorder %s335, %s336
    %p348 = scmp.eq.s32.totalorder %s29, 1
    %p349 = por %p347, %p348
    %p351 = scmp.ne.s32.totalorder %s336, %s350
    %p352 = scmp.eq.s32.totalorder %s29, 0
    %p353 = por %p351, %p352
    %s355 = sadd.s32 %s354, 1
    %p358 = scmp.eq.s32.totalorder %s23, 1
    %p359 = scmp.ne.s32.totalorder %s354, %s356
    %p360 = scmp.eq.s32.totalorder %s23, 0
    %p361 = por %p359, %p360
    %p362 = scmp.ne.s32.totalorder %s354, %s356
    %p363 = scmp.eq.s32.totalorder %s28, 1
    %p364 = por %p362, %p363
    %p365 = scmp.ne.s32.totalorder %s356, %s357
    %p366 = scmp.eq.s32.totalorder %s28, 0
    %p367 = por %p365, %p366
    %p368 = scmp.ne.s32.totalorder %s356, %s357
    %p369 = scmp.eq.s32.totalorder %s29, 1
    %p370 = por %p368, %p369
    %p372 = scmp.ne.s32.totalorder %s357, %s371
    %p373 = scmp.eq.s32.totalorder %s29, 0
    %p374 = por %p372, %p373
    %s376 = sadd.s32 %s375, 1
    %p379 = scmp.eq.s32.totalorder %s23, 1
    %p380 = scmp.ne.s32.totalorder %s375, %s377
    %p381 = scmp.eq.s32.totalorder %s23, 0
    %p382 = por %p380, %p381
    %p383 = scmp.ne.s32.totalorder %s375, %s377
    %p384 = scmp.eq.s32.totalorder %s28, 1
    %p385 = por %p383, %p384
    %p386 = scmp.ne.s32.totalorder %s377, %s378
    %p387 = scmp.eq.s32.totalorder %s28, 0
    %p388 = por %p386, %p387
    %p389 = scmp.ne.s32.totalorder %s377, %s378
    %p390 = scmp.eq.s32.totalorder %s29, 1
    %p391 = por %p389, %p390
    %p393 = scmp.ne.s32.totalorder %s378, %s392
    %p394 = scmp.eq.s32.totalorder %s29, 0
    %p395 = por %p393, %p394
    %s397 = sadd.s32 %s396, 1
    %p400 = scmp.eq.s32.totalorder %s23, 1
    %p401 = scmp.ne.s32.totalorder %s396, %s398
    %p402 = scmp.eq.s32.totalorder %s23, 0
    %p403 = por %p401, %p402
    %p404 = scmp.ne.s32.totalorder %s396, %s398
    %p405 = scmp.eq.s32.totalorder %s28, 1
    %p406 = por %p404, %p405
    %p407 = scmp.ne.s32.totalorder %s398, %s399
    %p408 = scmp.eq.s32.totalorder %s28, 0
    %p409 = por %p407, %p408
    %p410 = scmp.ne.s32.totalorder %s398, %s399
    %p411 = scmp.eq.s32.totalorder %s29, 1
    %p412 = por %p410, %p411
    %p414 = scmp.ne.s32.totalorder %s399, %s413
    %p415 = scmp.eq.s32.totalorder %s29, 0
    %p416 = por %p414, %p415
    %s417 = ssub.s32 %s30, %s42
    %p418 = scmp.eq.s32.totalorder %s417, 0
    %s420 = sadd.s32 %s419, 1
    %s421 = scalar_select %p418, %s419, %s420
    %p424 = pneg %p418
    %p425 = scmp.eq.s32.totalorder %s23, 1
    %p426 = por %p424, %p425
    %p427 = scmp.ne.s32.totalorder %s419, %s422
    %p428 = scmp.eq.s32.totalorder %s23, 0
    %p429 = por %p427, %p428
    %p430 = scmp.ne.s32.totalorder %s419, %s422
    %p431 = scmp.eq.s32.totalorder %s28, 1
    %p432 = por %p430, %p431
    %p433 = scmp.ne.s32.totalorder %s422, %s423
    %p434 = scmp.eq.s32.totalorder %s28, 0
    %p435 = por %p433, %p434
    %p436 = scmp.ne.s32.totalorder %s422, %s423
    %p437 = scmp.eq.s32.totalorder %s29, 1
    %p438 = por %p436, %p437
    %p440 = scmp.ne.s32.totalorder %s423, %s439
    %p441 = scmp.eq.s32.totalorder %s29, 0
    %p442 = por %p440, %p441
    %p443 = scmp.le.s32.totalorder 1, %s23
    %p444 = scmp.lt.s32.totalorder %s23, 3
    %p445 = pnand %p443, %p444
    %p446 = pneg %p445
    // Predicated region
    $region9: #{contrastive_forward.2} parent=5 // pred_check
      _
    $region10: #{contrastive_forward.2} parent=5 // pred_check_branch
      %448 = sbr.rel (%p445) target = $region12
    $region11: #{contrastive_forward.2} parent=5 // pred_region
      %s449 = ssub.s32 %s23, 1
      // Predicated region
      $region13: #{contrastive_forward.2} parent=11 // pred_check
        %p450 = pneg %p89
      $region14: #{contrastive_forward.2} parent=11 // pred_check_branch
        %452 = sbr.rel (%p450) target = $region16
      $region15: #{contrastive_forward.2} parent=11 // pred_region
        %s453 = smul.u32 2, %s32
        %p454 = scmp.lt.s32.totalorder %s453, 1
        %s455 = scalar_select %p454, %s453, 1
        %s456 = smul.addr %s455, 8
        %s457 = scalar_lea.vmem %s1, %s456
        %s458 = smul.u32 2, %s32
      $region16: #{contrastive_forward.2} parent=11 // pred_fallthru
        _
      // Predicated region
      $region17: #{contrastive_forward.2} parent=11 // pred_check
        %p459 = pneg %p115
      $region18: #{contrastive_forward.2} parent=11 // pred_check_branch
        %461 = sbr.rel (%p459) target = $region20
      $region19: #{contrastive_forward.2} parent=11 // pred_region
        %s462 = smul.u32 2, %s32
        %p463 = scmp.lt.s32.totalorder %s462, 1
        %s464 = scalar_select %p463, %s462, 1
        %s465 = smul.addr %s464, 8
        %s466 = scalar_lea.vmem %s2, %s465
        %s467 = smul.u32 2, %s32
      $region20: #{contrastive_forward.2} parent=11 // pred_fallthru
        _
      // Predicated region
      $region21: #{contrastive_forward.2} parent=11 // pred_check
        %p468 = pneg %p136
      $region22: #{contrastive_forward.2} parent=11 // pred_check_branch
        %470 = sbr.rel (%p468) target = $region24
      $region23: #{contrastive_forward.2} parent=11 // pred_region
        _
      $region24: #{contrastive_forward.2} parent=11 // pred_fallthru
        _
      // Predicated region
      $region25: #{contrastive_forward.2} parent=11 // pred_check
        %p471 = pneg %p157
      $region26: #{contrastive_forward.2} parent=11 // pred_check_branch
        %473 = sbr.rel (%p471) target = $region28
      $region27: #{contrastive_forward.2} parent=11 // pred_region
        _
      $region28: #{contrastive_forward.2} parent=11 // pred_fallthru
        _
      // Predicated region
      $region29: #{contrastive_forward.2} parent=11 // pred_check
        %p474 = pneg %p178
      $region30: #{contrastive_forward.2} parent=11 // pred_check_branch
        %476 = sbr.rel (%p474) target = $region32
      $region31: #{contrastive_forward.2} parent=11 // pred_region
        _
      $region32: #{contrastive_forward.2} parent=11 // pred_fallthru
        _
      // Predicated region
      $region33: #{contrastive_forward.2} parent=11 // pred_check
        %p477 = pneg %p199
      $region34: #{contrastive_forward.2} parent=11 // pred_check_branch
        %479 = sbr.rel (%p477) target = $region36
      $region35: #{contrastive_forward.2} parent=11 // pred_region
        _
      $region36: #{contrastive_forward.2} parent=11 // pred_fallthru
        _
      // Predicated region
      $region37: #{contrastive_forward.2} parent=11 // pred_check
        %p480 = pneg %p220
      $region38: #{contrastive_forward.2} parent=11 // pred_check_branch
        %482 = sbr.rel (%p480) target = $region40
      $region39: #{contrastive_forward.2} parent=11 // pred_region
        _
      $region40: #{contrastive_forward.2} parent=11 // pred_fallthru
        _
      // Predicated region
      $region41: #{contrastive_forward.2} parent=11 // pred_check
        %p483 = pneg %p241
      $region42: #{contrastive_forward.2} parent=11 // pred_check_branch
        %485 = sbr.rel (%p483) target = $region44
      $region43: #{contrastive_forward.2} parent=11 // pred_region
        _
      $region44: #{contrastive_forward.2} parent=11 // pred_fallthru
        _
      // Predicated region
      $region45: #{contrastive_forward.2} parent=11 // pred_check
        %p486 = pneg %p262
      $region46: #{contrastive_forward.2} parent=11 // pred_check_branch
        %488 = sbr.rel (%p486) target = $region48
      $region47: #{contrastive_forward.2} parent=11 // pred_region
        _
      $region48: #{contrastive_forward.2} parent=11 // pred_fallthru
        _
      // Predicated region
      $region49: #{contrastive_forward.2} parent=11 // pred_check
        %p489 = pneg %p283
      $region50: #{contrastive_forward.2} parent=11 // pred_check_branch
        %491 = sbr.rel (%p489) target = $region52
      $region51: #{contrastive_forward.2} parent=11 // pred_region
        _
      $region52: #{contrastive_forward.2} parent=11 // pred_fallthru
        _
      // Predicated region
      $region53: #{contrastive_forward.2} parent=11 // pred_check
        %p492 = pneg %p304
      $region54: #{contrastive_forward.2} parent=11 // pred_check_branch
        %494 = sbr.rel (%p492) target = $region56
      $region55: #{contrastive_forward.2} parent=11 // pred_region
        _
      $region56: #{contrastive_forward.2} parent=11 // pred_fallthru
        _
      // Predicated region
      $region57: #{contrastive_forward.2} parent=11 // pred_check
        %p495 = pneg %p325
      $region58: #{contrastive_forward.2} parent=11 // pred_check_branch
        %497 = sbr.rel (%p495) target = $region60
      $region59: #{contrastive_forward.2} parent=11 // pred_region
        _
      $region60: #{contrastive_forward.2} parent=11 // pred_fallthru
        _
      // Predicated region
      $region61: #{contrastive_forward.2} parent=11 // pred_check
        %p498 = pneg %p346
      $region62: #{contrastive_forward.2} parent=11 // pred_check_branch
        %500 = sbr.rel (%p498) target = $region64
      $region63: #{contrastive_forward.2} parent=11 // pred_region
        _
      $region64: #{contrastive_forward.2} parent=11 // pred_fallthru
        _
      // Predicated region
      $region65: #{contrastive_forward.2} parent=11 // pred_check
        %p501 = pneg %p367
      $region66: #{contrastive_forward.2} parent=11 // pred_check_branch
        %503 = sbr.rel (%p501) target = $region68
      $region67: #{contrastive_forward.2} parent=11 // pred_region
        _
      $region68: #{contrastive_forward.2} parent=11 // pred_fallthru
        _
      // Predicated region
      $region69: #{contrastive_forward.2} parent=11 // pred_check
        %p504 = pneg %p388
      $region70: #{contrastive_forward.2} parent=11 // pred_check_branch
        %506 = sbr.rel (%p504) target = $region72
      $region71: #{contrastive_forward.2} parent=11 // pred_region
        _
      $region72: #{contrastive_forward.2} parent=11 // pred_fallthru
        _
      // Predicated region
      $region73: #{contrastive_forward.2} parent=11 // pred_check
        %p507 = pneg %p409
      $region74: #{contrastive_forward.2} parent=11 // pred_check_branch
        %509 = sbr.rel (%p507) target = $region76
      $region75: #{contrastive_forward.2} parent=11 // pred_region
        _
      $region76: #{contrastive_forward.2} parent=11 // pred_fallthru
        _
    $region12: #{contrastive_forward.2} parent=5 // pred_fallthru
      _
    %p510 = scmp.lt.s32.totalorder %s23, 2
    // Predicated region
    $region77: #{contrastive_forward.2} parent=5 // pred_check
      %p511 = pneg %p510
    $region78: #{contrastive_forward.2} parent=5 // pred_check_branch
      %513 = sbr.rel (%p511) target = $region80
    $region79: #{contrastive_forward.2} parent=5 // pred_region
      // Predicated region
      $region81: #{contrastive_forward.2} parent=79 // pred_check
        %p514 = pneg %p57
      $region82: #{contrastive_forward.2} parent=79 // pred_check_branch
        %516 = sbr.rel (%p514) target = $region84
      $region83: #{contrastive_forward.2} parent=79 // pred_region
        %p517 = scmp.lt.s32.totalorder %s30, 0
        %s518 = scalar_select %p517, %s30, 0
        %p519 = scmp.lt.s32.totalorder %s31, 1
        %s520 = scalar_select %p519, %s31, 1
        %s521 = smul.addr %s518, 2
        %s522 = sadd.s32 %s520, %s521
        %s523 = smul.addr %s522, 8
        %s524 = scalar_lea.vmem %s0, %s523
      $region84: #{contrastive_forward.2} parent=79 // pred_fallthru
        _
    $region80: #{contrastive_forward.2} parent=5 // pred_fallthru
      _
    %p525 = scmp.le.s32.totalorder 1, %s23
    %p526 = scmp.lt.s32.totalorder %s23, 3
    %p527 = pnand %p525, %p526
    %p528 = pneg %p527
    // Predicated region
    $region85: #{contrastive_forward.2} parent=5 // pred_check
      _
    $region86: #{contrastive_forward.2} parent=5 // pred_check_branch
      %530 = sbr.rel (%p527) target = $region88
    $region87: #{contrastive_forward.2} parent=5 // pred_region
      %s531 = ssub.s32 %s23, 1
      %p532 = scmp.lt.s32.totalorder %s32, 0
      %s533 = scalar_select %p532, %s32, 0
      %p534 = scmp.lt.s32.totalorder %s33, 1
      %s535 = scalar_select %p534, %s33, 1
      %s536 = smul.addr %s533, 2
      %s537 = sadd.s32 %s535, %s536
      %s538 = smul.addr %s537, 8
      %s539 = scalar_lea.vmem %s0, %s538
      %p540 = pneg %p63
      %p541 = pneg %p60
      %s542 = smul.u32 2, %s32
      %p543 = scmp.lt.s32.totalorder %s542, 1
      %s544 = scalar_select %p543, %s542, 1
      %s545 = smul.addr %s544, 8
      %s546 = scalar_lea.vmem %s1, %s545
      %p547 = pneg %p89
      %p548 = pneg %p86
      %s549 = smul.u32 2, %s32
      %p550 = scmp.lt.s32.totalorder %s549, 1
      %s551 = scalar_select %p550, %s549, 1
      %s552 = smul.addr %s551, 8
      %s553 = scalar_lea.vmem %s2, %s552
      %p554 = pneg %p115
      %p555 = pneg %p112
      %p556 = pneg %p136
      %p557 = pneg %p133
      %p558 = pneg %p157
      %p559 = pneg %p154
      %p560 = pneg %p178
      %p561 = pneg %p175
      %p562 = pneg %p199
      %p563 = pneg %p196
      %p564 = pneg %p220
      %p565 = pneg %p217
      %p566 = pneg %p241
      %p567 = pneg %p238
      %p568 = pneg %p262
      %p569 = pneg %p259
      %p570 = pneg %p283
      %p571 = pneg %p280
      %p572 = pneg %p304
      %p573 = pneg %p301
      %p574 = pneg %p325
      %p575 = pneg %p322
      %p576 = pneg %p346
      %p577 = pneg %p343
      %p578 = pneg %p367
      %p579 = pneg %p364
      %p580 = pneg %p388
      %p581 = pneg %p385
      %p582 = pneg %p409
      %p583 = pneg %p406
      %p584 = pneg %p435
      %p585 = pneg %p432
      %p586 = scmp.lt.s32.totalorder %s32, 0
      %s587 = scalar_select %p586, %s32, 0
      %s588 = smul.addr %s587, 2
      %s589 = scalar_lea.vmem %s17, %s588
      %p590 = scmp.lt.s32.totalorder %s32, 0
      %s591 = scalar_select %p590, %s32, 0
      %p592 = scmp.lt.s32.totalorder %s33, 1
      %s593 = scalar_select %p592, %s33, 1
      %s594 = smul.addr %s591, 2
      %s595 = sadd.s32 %s593, %s594
      %s596 = smul.addr %s595, 8
      %s597 = scalar_lea.vmem %s0, %s596
      %s598 = smul.u32 2, %s32
      %p599 = scmp.lt.s32.totalorder %s598, 1
      %s600 = scalar_select %p599, %s598, 1
      %s601 = smul.addr %s600, 8
      %s602 = scalar_lea.vmem %s1, %s601
      %s603 = smul.u32 2, %s32
      %s604 = smul.u32 2, %s32
      %p605 = scmp.lt.s32.totalorder %s604, 1
      %s606 = scalar_select %p605, %s604, 1
      %s607 = smul.addr %s606, 8
      %s608 = scalar_lea.vmem %s2, %s607
      %s609 = smul.u32 2, %s32
      %p610 = scmp.lt.s32.totalorder %s32, 0
      %s611 = scalar_select %p610, %s32, 0
      %s612 = smul.addr %s611, 2
      %s613 = scalar_lea.vmem %s17, %s612
      %p615 = scmp.eq.s32.totalorder %s33, 0
      // Predicated region
      $region89: #{contrastive_forward.2} parent=87 // pred_check
        %p616 = pneg %p615
      $region90: #{contrastive_forward.2} parent=87 // pred_check_branch
        %618 = sbr.rel (%p616) target = $region92
      $region91: #{contrastive_forward.2} parent=87 // pred_region
        %vm619 = vcmask 7168
        %620 = vst.msk [vmem:[#allocation2] sm:$0xff] %vm619, 0.0
      $region92: #{contrastive_forward.2} parent=87 // pred_fallthru
        _
      %v621 = vld [vmem:[#allocation2] sm:$0xff]
      %v622 = vld [vmem:[%s597] sm:$0xff]
      %623 = vadd.xlane.f32.xlu0 %v622
      %v624 = vpop.xlane.xlu0 %623
      %v625 = vadd.f32 %v621, %v624
      %vm626 = vcmask 7168
      %627 = vst.msk [vmem:[#allocation2] sm:$0xff] %vm626, %v625
      %p628 = scmp.eq.s32.totalorder %s33, 1
      // Predicated region
      $region93: #{contrastive_forward.2} parent=87 // pred_check
        %p629 = pneg %p628
      $region94: #{contrastive_forward.2} parent=87 // pred_check_branch
        %631 = sbr.rel (%p629) target = $region96
      $region95: #{contrastive_forward.2} parent=87 // pred_region
        %v632 = vld [vmem:[#allocation2] sm:$0xff]
        %v633 = vld [vmem:[%s3] sm:$0xff]
        %635 = vset.pattern.permute.xlu0 0
        %636 = vperm.xlu0 %635, %v632
        %v637 = vpop.permute.xlu0 %636
        %v639 = vmul.f32 %v637, %v633
        %v640 = vld [vmem:[%s4] sm:$0x3]
        %vm641 = vcmask 64512
        %v643 = vsel %vm641, %v640, 0
        %645 = vmatprep.subr.mxu0 0.0
        %646 = vmatpush1.msra.mxu0 0.0
        %647 = vmatprep.subr.mxu0 0.0
        %648 = vmatpush1.msra.mxu0 0.0
        %649 = vmatprep.subr.mxu0 0.0
        %650 = vmatpush1.msra.mxu0 0.0
        %651 = vmatprep.subr.mxu0 0.0
        %652 = vmatpush1.msra.mxu0 0.0
        %653 = vmatprep.subr.mxu0 0.0
        %654 = vmatpush1.msra.mxu0 0.0
        %655 = vmatprep.subr.mxu0 0.0
        %656 = vmatpush1.msra.mxu0 0.0
        %657 = vmatprep.subr.mxu0 0.0
        %658 = vmatpush1.msra.mxu0 0.0
        %659 = vmatprep.subr.mxu0 0.0
        %660 = vmatpush1.msra.mxu0 0.0
        %661 = vmatprep.subr.mxu0 0.0
        %662 = vmatpush1.msra.mxu0 0.0
        %663 = vmatprep.subr.mxu0 0.0
        %664 = vmatpush1.msra.mxu0 0.0
        %665 = vmatprep.subr.mxu0 0.0
        %666 = vmatpush1.msra.mxu0 0.0
        %667 = vmatprep.subr.mxu0 0.0
        %668 = vmatpush1.msra.mxu0 0.0
        %669 = vmatprep.subr.mxu0 0.0
        %670 = vmatpush1.msra.mxu0 0.0
        %671 = vmatprep.subr.mxu0 0.0
        %672 = vmatpush1.msra.mxu0 0.0
        %673 = vmatprep.subr.mxu0 0.0
        %674 = vmatpush1.msra.mxu0 0.0
        %675 = vmatprep.subr.mxu0 0.0
        %676 = vmatpush1.msra.mxu0 %v639
        %677 = vmatprep.subr.mxu0 0.0
        %678 = vmatpush2.msra.mxu0 0.0
        %679 = vmatprep.subr.mxu0 0.0
        %680 = vmatpush2.msra.mxu0 0.0
        %681 = vmatprep.subr.mxu0 0.0
        %682 = vmatpush2.msra.mxu0 0.0
        %683 = vmatprep.subr.mxu0 0.0
        %684 = vmatpush2.msra.mxu0 0.0
        %685 = vmatprep.subr.mxu0 0.0
        %686 = vmatpush2.msra.mxu0 0.0
        %687 = vmatprep.subr.mxu0 0.0
        %688 = vmatpush2.msra.mxu0 0.0
        %689 = vmatprep.subr.mxu0 0.0
        %690 = vmatpush2.msra.mxu0 0.0
        %691 = vmatprep.subr.mxu0 0.0
        %692 = vmatpush2.msra.mxu0 0.0
        %693 = vmatprep.subr.mxu0 0.0
        %694 = vmatpush2.msra.mxu0 0.0
        %695 = vmatprep.subr.mxu0 0.0
        %696 = vmatpush2.msra.mxu0 0.0
        %697 = vmatprep.subr.mxu0 0.0
        %698 = vmatpush2.msra.mxu0 0.0
        %699 = vmatprep.subr.mxu0 0.0
        %700 = vmatpush2.msra.mxu0 0.0
        %701 = vmatprep.subr.mxu0 0.0
        %702 = vmatpush2.msra.mxu0 0.0
        %703 = vmatprep.subr.mxu0 0.0
        %704 = vmatpush2.msra.mxu0 0.0
        %705 = vmatprep.subr.mxu0 0.0
        %706 = vmatpush2.msra.mxu0 0.0
        %707 = vmatprep.subr.mxu0 0.0
        %708 = vmatpush2.msra.mxu0 0.0
        %709 = vmatprep.mubr.f32.mxu0 0.0
        %710 = vmatmul.mubr.f32.gmra.mxu0 %v643
        %v711 = vpop.f32.mrf.mxu0
        %v712 = vadd.f32 0.0, %v711
        %v713 = vpop.f32.mrf.mxu0
        %714 = vdwg.mxu0
        %v715 = vmul.f32 %v712, 0.00390625
        %v716 = vld [vmem:[%s602] sm:$0xff]
        %v717 = vld [vmem:[%s602 + $0x8] sm:$0xff]
        %vm718 = vcmask 261120
        %v719 = vsel %vm718, %v716, 0.0
        %v720 = vrot.slane %v719, 4
        %v721 = vadd.f32 %v719, %v720
        %v722 = vrot.slane %v721, 2
        %v723 = vadd.f32 %v721, %v722
        %v724 = vrot.slane %v723, 1
        %v725 = vadd.f32 %v723, %v724
        %v726 = vsel %vm718, %v717, 0.0
        %v727 = vrot.slane %v726, 4
        %v728 = vadd.f32 %v726, %v727
        %v729 = vrot.slane %v728, 2
        %v730 = vadd.f32 %v728, %v729
        %v731 = vrot.slane %v730, 1
        %v732 = vadd.f32 %v730, %v731
        %v733 = vrcp.pop 8.0
        %v734 = vmul.f32 %v725, %v733
        %v735 = vmul.f32 %v732, %v733
        %v736 = vld [vmem:[%s608] sm:$0xff]
        %v737 = vld [vmem:[%s608 + $0x8] sm:$0xff]
        %v738 = vsel %vm718, %v736, 0.0
        %v739 = vrot.slane %v738, 4
        %v740 = vadd.f32 %v738, %v739
        %v741 = vrot.slane %v740, 2
        %v742 = vadd.f32 %v740, %v741
        %v743 = vrot.slane %v742, 1
        %v744 = vadd.f32 %v742, %v743
        %v745 = vsel %vm718, %v737, 0.0
        %v746 = vrot.slane %v745, 4
        %v747 = vadd.f32 %v745, %v746
        %v748 = vrot.slane %v747, 2
        %v749 = vadd.f32 %v747, %v748
        %v750 = vrot.slane %v749, 1
        %v751 = vadd.f32 %v749, %v750
        %v752 = vmul.f32 %v744, %v733
        %v753 = vmul.f32 %v751, %v733
        %v754 = vpack.c.bf16 %v715, %v715
        %v755 = vld [vmem:[%s5] sm:$0x3]
        %v756 = vld [vmem:[%s6] sm:$0x1]
        %v758 = vlaneseq
        %v759 = vshrl.u32 %v758, 7
        %v760 = vsub.s32 0, %v759
        %v761 = vrot.slane %v756, %v760
        %vm763 = vcmask 31744
        %v765 = vsel %vm763, %v754, 0
        %vm767 = vcmask 1041408
        %v769 = vsel %vm767, %v755, 0
        %771 = vmatprep.subr.bf16.mxu0 0
        %772 = vmatpush1.bf16.msra.mxu0 0
        %773 = vmatprep.subr.bf16.mxu0 0
        %774 = vmatpush1.bf16.msra.mxu0 0
        %775 = vmatprep.subr.bf16.mxu0 0
        %776 = vmatpush1.bf16.msra.mxu0 0
        %777 = vmatprep.subr.bf16.mxu0 0
        %778 = vmatpush1.bf16.msra.mxu0 0
        %779 = vmatprep.subr.bf16.mxu0 0
        %780 = vmatpush1.bf16.msra.mxu0 0
        %781 = vmatprep.subr.bf16.mxu0 0
        %782 = vmatpush1.bf16.msra.mxu0 0
        %783 = vmatprep.subr.bf16.mxu0 0
        %784 = vmatpush1.bf16.msra.mxu0 0
        %785 = vmatprep.subr.bf16.mxu0 0
        %786 = vmatpush1.bf16.msra.mxu0 %v769
        %787 = vmatprep.subr.bf16.mxu0 0
        %788 = vmatpush2.bf16.msra.mxu0 0
        %789 = vmatprep.subr.bf16.mxu0 0
        %790 = vmatpush2.bf16.msra.mxu0 0
        %791 = vmatprep.subr.bf16.mxu0 0
        %792 = vmatpush2.bf16.msra.mxu0 0
        %793 = vmatprep.subr.bf16.mxu0 0
        %794 = vmatpush2.bf16.msra.mxu0 0
        %795 = vmatprep.subr.bf16.mxu0 0
        %796 = vmatpush2.bf16.msra.mxu0 0
        %797 = vmatprep.subr.bf16.mxu0 0
        %798 = vmatpush2.bf16.msra.mxu0 0
        %799 = vmatprep.subr.bf16.mxu0 0
        %800 = vmatpush2.bf16.msra.mxu0 0
        %801 = vmatprep.subr.bf16.mxu0 0
        %802 = vmatpush2.bf16.msra.mxu0 0
        %803 = vmatprep.mubr.bf16.mxu0 0
        %804 = vmatmul.mubr.bf16.gmra.mxu0 %v765
        %v805 = vpop.f32.mrf.mxu0
        %v806 = vadd.f32 %v761, %v805
        %v807 = vpop.f32.mrf.mxu0
        %v808 = vpop.f32.mrf.mxu0
        %v809 = vpop.f32.mrf.mxu0
        %810 = vdwg.mxu0
        %v811 = vpack.c.bf16 %v734, %v734
        %v812 = vpack.c.bf16 %v735, %v735
        %v813 = vld [vmem:[%s7] sm:$0xf]
        %v814 = vld [vmem:[%s7 + $0x4] sm:$0xf]
        %v815 = vld [vmem:[%s7 + $0x8] sm:$0xf]
        %v816 = vld [vmem:[%s7 + $0xc] sm:$0xf]
        %v817 = vld [vmem:[%s8] sm:$0x1]
        %v819 = vlaneseq
        %v820 = vshrl.u32 %v819, 7
        %v821 = vsub.s32 0, %v820
        %v822 = vrot.slane %v817, %v821
        %v826 = vunpack.c.l.b16 %v811
        %v827 = vunpack.c.l.b16 %v812
        %vm828 = vcmask 1041409
        %v829 = vsel %vm828, %v827, %v826
        %v830 = vpack.c.b16 %v829, %v829
        %v835 = vunpack.c.l.b16 %v813
        %v836 = vunpack.c.l.b16 %v814
        %v837 = vunpack.c.l.b16 %v815
        %v838 = vunpack.c.l.b16 %v816
        %v839 = vpack.c.b16 %v836, %v835
        %v840 = vpack.c.b16 %v838, %v837
        %v844 = vsel %vm718, %v830, 0
        %846 = vmatprep.subr.bf16.mxu0 0
        %847 = vmatpush1.bf16.msra.mxu0 0
        %848 = vmatprep.subr.bf16.mxu0 0
        %849 = vmatpush1.bf16.msra.mxu0 0
        %850 = vmatprep.subr.bf16.mxu0 0
        %851 = vmatpush1.bf16.msra.mxu0 0
        %852 = vmatprep.subr.bf16.mxu0 0
        %853 = vmatpush1.bf16.msra.mxu0 0
        %854 = vmatprep.subr.bf16.mxu0 0
        %855 = vmatpush1.bf16.msra.mxu0 0
        %856 = vmatprep.subr.bf16.mxu0 0
        %857 = vmatpush1.bf16.msra.mxu0 0
        %858 = vmatprep.subr.bf16.mxu0 0
        %859 = vmatpush1.bf16.msra.mxu0 %v840
        %860 = vmatprep.subr.bf16.mxu0 0
        %861 = vmatpush1.bf16.msra.mxu0 %v839
        %862 = vmatprep.subr.bf16.mxu0 0
        %863 = vmatpush2.bf16.msra.mxu0 0
        %864 = vmatprep.subr.bf16.mxu0 0
        %865 = vmatpush2.bf16.msra.mxu0 0
        %866 = vmatprep.subr.bf16.mxu0 0
        %867 = vmatpush2.bf16.msra.mxu0 0
        %868 = vmatprep.subr.bf16.mxu0 0
        %869 = vmatpush2.bf16.msra.mxu0 0
        %870 = vmatprep.subr.bf16.mxu0 0
        %871 = vmatpush2.bf16.msra.mxu0 0
        %872 = vmatprep.subr.bf16.mxu0 0
        %873 = vmatpush2.bf16.msra.mxu0 0
        %874 = vmatprep.subr.bf16.mxu0 0
        %875 = vmatpush2.bf16.msra.mxu0 0
        %876 = vmatprep.subr.bf16.mxu0 0
        %877 = vmatpush2.bf16.msra.mxu0 0
        %878 = vmatprep.mubr.bf16.mxu0 0
        %879 = vmatmul.mubr.bf16.gmra.mxu0 %v844
        %v880 = vpop.f32.mrf.mxu0
        %v881 = vadd.f32 %v822, %v880
        %v882 = vpop.f32.mrf.mxu0
        %v883 = vpop.f32.mrf.mxu0
        %v884 = vpop.f32.mrf.mxu0
        %885 = vdwg.mxu0
        %v886 = vpack.c.bf16 %v752, %v752
        %v887 = vpack.c.bf16 %v753, %v753
        %v888 = vld [vmem:[%s9] sm:$0xf]
        %v889 = vld [vmem:[%s9 + $0x4] sm:$0xf]
        %v890 = vld [vmem:[%s9 + $0x8] sm:$0xf]
        %v891 = vld [vmem:[%s9 + $0xc] sm:$0xf]
        %v892 = vld [vmem:[%s10] sm:$0x1]
        %v894 = vlaneseq
        %v895 = vshrl.u32 %v894, 7
        %v896 = vsub.s32 0, %v895
        %v897 = vrot.slane %v892, %v896
        %v901 = vunpack.c.l.b16 %v886
        %v902 = vunpack.c.l.b16 %v887
        %v903 = vsel %vm828, %v902, %v901
        %v904 = vpack.c.b16 %v903, %v903
        %v909 = vunpack.c.l.b16 %v888
        %v910 = vunpack.c.l.b16 %v889
        %v911 = vunpack.c.l.b16 %v890
        %v912 = vunpack.c.l.b16 %v891
        %v913 = vpack.c.b16 %v910, %v909
        %v914 = vpack.c.b16 %v912, %v911
        %v918 = vsel %vm718, %v904, 0
        %920 = vmatprep.subr.bf16.mxu0 0
        %921 = vmatpush1.bf16.msra.mxu0 0
        %922 = vmatprep.subr.bf16.mxu0 0
        %923 = vmatpush1.bf16.msra.mxu0 0
        %924 = vmatprep.subr.bf16.mxu0 0
        %925 = vmatpush1.bf16.msra.mxu0 0
        %926 = vmatprep.subr.bf16.mxu0 0
        %927 = vmatpush1.bf16.msra.mxu0 0
        %928 = vmatprep.subr.bf16.mxu0 0
        %929 = vmatpush1.bf16.msra.mxu0 0
        %930 = vmatprep.subr.bf16.mxu0 0
        %931 = vmatpush1.bf16.msra.mxu0 0
        %932 = vmatprep.subr.bf16.mxu0 0
        %933 = vmatpush1.bf16.msra.mxu0 %v914
        %934 = vmatprep.subr.bf16.mxu0 0
        %935 = vmatpush1.bf16.msra.mxu0 %v913
        %936 = vmatprep.subr.bf16.mxu0 0
        %937 = vmatpush2.bf16.msra.mxu0 0
        %938 = vmatprep.subr.bf16.mxu0 0
        %939 = vmatpush2.bf16.msra.mxu0 0
        %940 = vmatprep.subr.bf16.mxu0 0
        %941 = vmatpush2.bf16.msra.mxu0 0
        %942 = vmatprep.subr.bf16.mxu0 0
        %943 = vmatpush2.bf16.msra.mxu0 0
        %944 = vmatprep.subr.bf16.mxu0 0
        %945 = vmatpush2.bf16.msra.mxu0 0
        %946 = vmatprep.subr.bf16.mxu0 0
        %947 = vmatpush2.bf16.msra.mxu0 0
        %948 = vmatprep.subr.bf16.mxu0 0
        %949 = vmatpush2.bf16.msra.mxu0 0
        %950 = vmatprep.subr.bf16.mxu0 0
        %951 = vmatpush2.bf16.msra.mxu0 0
        %952 = vmatprep.mubr.bf16.mxu0 0
        %953 = vmatmul.mubr.bf16.gmra.mxu0 %v918
        %v954 = vpop.f32.mrf.mxu0
        %v955 = vadd.f32 %v897, %v954
        %v956 = vpop.f32.mrf.mxu0
        %v957 = vpop.f32.mrf.mxu0
        %v958 = vpop.f32.mrf.mxu0
        %959 = vdwg.mxu0
        %v960 = vpack.c.bf16 %v806, %v806
        %v961 = vld [vmem:[%s11] sm:$0xf]
        %v962 = vld [vmem:[%s11 + $0x4] sm:$0xf]
        %v963 = vld [vmem:[%s11 + $0x8] sm:$0xf]
        %v964 = vld [vmem:[%s11 + $0xc] sm:$0xf]
        %v965 = vld [vmem:[%s12] sm:$0x1]
        %v967 = vlaneseq
        %v968 = vshrl.u32 %v967, 7
        %v969 = vsub.s32 0, %v968
        %v970 = vrot.slane %v965, %v969
        %v976 = vunpack.c.l.b16 %v961
        %v977 = vunpack.c.l.b16 %v962
        %v978 = vunpack.c.l.b16 %v963
        %v979 = vunpack.c.l.b16 %v964
        %v980 = vpack.c.b16 %v977, %v976
        %v981 = vpack.c.b16 %v979, %v978
        %v985 = vsel %vm718, %v960, 0
        %987 = vmatprep.subr.bf16.mxu0 0
        %988 = vmatpush1.bf16.msra.mxu0 0
        %989 = vmatprep.subr.bf16.mxu0 0
        %990 = vmatpush1.bf16.msra.mxu0 0
        %991 = vmatprep.subr.bf16.mxu0 0
        %992 = vmatpush1.bf16.msra.mxu0 0
        %993 = vmatprep.subr.bf16.mxu0 0
        %994 = vmatpush1.bf16.msra.mxu0 0
        %995 = vmatprep.subr.bf16.mxu0 0
        %996 = vmatpush1.bf16.msra.mxu0 0
        %997 = vmatprep.subr.bf16.mxu0 0
        %998 = vmatpush1.bf16.msra.mxu0 0
        %999 = vmatprep.subr.bf16.mxu0 0
        %1000 = vmatpush1.bf16.msra.mxu0 %v981
        %1001 = vmatprep.subr.bf16.mxu0 0
        %1002 = vmatpush1.bf16.msra.mxu0 %v980
        %1003 = vmatprep.subr.bf16.mxu0 0
        %1004 = vmatpush2.bf16.msra.mxu0 0
        %1005 = vmatprep.subr.bf16.mxu0 0
        %1006 = vmatpush2.bf16.msra.mxu0 0
        %1007 = vmatprep.subr.bf16.mxu0 0
        %1008 = vmatpush2.bf16.msra.mxu0 0
        %1009 = vmatprep.subr.bf16.mxu0 0
        %1010 = vmatpush2.bf16.msra.mxu0 0
        %1011 = vmatprep.subr.bf16.mxu0 0
        %1012 = vmatpush2.bf16.msra.mxu0 0
        %1013 = vmatprep.subr.bf16.mxu0 0
        %1014 = vmatpush2.bf16.msra.mxu0 0
        %1015 = vmatprep.subr.bf16.mxu0 0
        %1016 = vmatpush2.bf16.msra.mxu0 0
        %1017 = vmatprep.subr.bf16.mxu0 0
        %1018 = vmatpush2.bf16.msra.mxu0 0
        %1019 = vmatprep.mubr.bf16.mxu0 0
        %1020 = vmatmul.mubr.bf16.gmra.mxu0 %v985
        %v1021 = vpop.f32.mrf.mxu0
        %v1022 = vadd.f32 %v970, %v1021
        %v1023 = vpop.f32.mrf.mxu0
        %v1024 = vpop.f32.mrf.mxu0
        %v1025 = vpop.f32.mrf.mxu0
        %1026 = vdwg.mxu0
        %v1027 = vpack.c.bf16 %v881, %v881
        %v1028 = vld [vmem:[%s13] sm:$0xf]
        %v1029 = vld [vmem:[%s13 + $0x4] sm:$0xf]
        %v1030 = vld [vmem:[%s13 + $0x8] sm:$0xf]
        %v1031 = vld [vmem:[%s13 + $0xc] sm:$0xf]
        %v1032 = vld [vmem:[%s13 + $0x10] sm:$0xf]
        %v1033 = vld [vmem:[%s13 + $0x14] sm:$0xf]
        %v1034 = vld [vmem:[%s14] sm:$0x1]
        %v1036 = vlaneseq
        %v1037 = vshrl.u32 %v1036, 7
        %v1038 = vsub.s32 0, %v1037
        %v1039 = vrot.slane %v1034, %v1038
        %v1047 = vunpack.c.l.b16 %v1028
        %v1048 = vunpack.c.l.b16 %v1029
        %v1049 = vunpack.c.l.b16 %v1030
        %v1050 = vunpack.c.l.b16 %v1031
        %v1051 = vunpack.c.l.b16 %v1032
        %v1052 = vunpack.c.l.b16 %v1033
        %v1053 = vpack.c.b16 %v1048, %v1047
        %v1054 = vpack.c.b16 %v1050, %v1049
        %v1055 = vpack.c.b16 %v1052, %v1051
        %vm1059 = vcmask 392192
        %v1061 = vsel %vm1059, %v1027, 0
        %1063 = vmatprep.subr.bf16.mxu0 0
        %1064 = vmatpush1.bf16.msra.mxu0 0
        %1065 = vmatprep.subr.bf16.mxu0 0
        %1066 = vmatpush1.bf16.msra.mxu0 0
        %1067 = vmatprep.subr.bf16.mxu0 0
        %1068 = vmatpush1.bf16.msra.mxu0 0
        %1069 = vmatprep.subr.bf16.mxu0 0
        %1070 = vmatpush1.bf16.msra.mxu0 0
        %1071 = vmatprep.subr.bf16.mxu0 0
        %1072 = vmatpush1.bf16.msra.mxu0 0
        %1073 = vmatprep.subr.bf16.mxu0 0
        %1074 = vmatpush1.bf16.msra.mxu0 %v1055
        %1075 = vmatprep.subr.bf16.mxu0 0
        %1076 = vmatpush1.bf16.msra.mxu0 %v1054
        %1077 = vmatprep.subr.bf16.mxu0 0
        %1078 = vmatpush1.bf16.msra.mxu0 %v1053
        %1079 = vmatprep.subr.bf16.mxu0 0
        %1080 = vmatpush2.bf16.msra.mxu0 0
        %1081 = vmatprep.subr.bf16.mxu0 0
        %1082 = vmatpush2.bf16.msra.mxu0 0
        %1083 = vmatprep.subr.bf16.mxu0 0
        %1084 = vmatpush2.bf16.msra.mxu0 0
        %1085 = vmatprep.subr.bf16.mxu0 0
        %1086 = vmatpush2.bf16.msra.mxu0 0
        %1087 = vmatprep.subr.bf16.mxu0 0
        %1088 = vmatpush2.bf16.msra.mxu0 0
        %1089 = vmatprep.subr.bf16.mxu0 0
        %1090 = vmatpush2.bf16.msra.mxu0 0
        %1091 = vmatprep.subr.bf16.mxu0 0
        %1092 = vmatpush2.bf16.msra.mxu0 0
        %1093 = vmatprep.subr.bf16.mxu0 0
        %1094 = vmatpush2.bf16.msra.mxu0 0
        %1095 = vmatprep.mubr.bf16.mxu0 0
        %1096 = vmatmul.mubr.bf16.gmra.mxu0 %v1061
        %v1097 = vpop.f32.mrf.mxu0
        %v1098 = vadd.f32 %v1039, %v1097
        %v1099 = vpop.f32.mrf.mxu0
        %v1100 = vpop.f32.mrf.mxu0
        %v1101 = vpop.f32.mrf.mxu0
        %1102 = vdwg.mxu0
        %v1103 = vpack.c.bf16 %v955, %v955
        %v1104 = vld [vmem:[%s15] sm:$0xf]
        %v1105 = vld [vmem:[%s15 + $0x4] sm:$0xf]
        %v1106 = vld [vmem:[%s15 + $0x8] sm:$0xf]
        %v1107 = vld [vmem:[%s15 + $0xc] sm:$0xf]
        %v1108 = vld [vmem:[%s15 + $0x10] sm:$0xf]
        %v1109 = vld [vmem:[%s15 + $0x14] sm:$0xf]
        %v1110 = vld [vmem:[%s15 + $0x18] sm:$0xf]
        %v1111 = vld [vmem:[%s15 + $0x1c] sm:$0xf]
        %v1112 = vld [vmem:[%s16] sm:$0x1]
        %v1114 = vlaneseq
        %v1115 = vshrl.u32 %v1114, 7
        %v1116 = vsub.s32 0, %v1115
        %v1117 = vrot.slane %v1112, %v1116
        %v1127 = vunpack.c.l.b16 %v1104
        %v1128 = vunpack.c.l.b16 %v1105
        %v1129 = vunpack.c.l.b16 %v1106
        %v1130 = vunpack.c.l.b16 %v1107
        %v1131 = vunpack.c.l.b16 %v1108
        %v1132 = vunpack.c.l.b16 %v1109
        %v1133 = vunpack.c.l.b16 %v1110
        %v1134 = vunpack.c.l.b16 %v1111
        %v1135 = vpack.c.b16 %v1128, %v1127
        %v1136 = vpack.c.b16 %v1130, %v1129
        %v1137 = vpack.c.b16 %v1132, %v1131
        %v1138 = vpack.c.b16 %v1134, %v1133
        %vm1143 = vcmask 523264
        %v1145 = vsel %vm1143, %v1103, 0
        %1147 = vmatprep.subr.bf16.mxu0 0
        %1148 = vmatpush1.bf16.msra.mxu0 0
        %1149 = vmatprep.subr.bf16.mxu0 0
        %1150 = vmatpush1.bf16.msra.mxu0 0
        %1151 = vmatprep.subr.bf16.mxu0 0
        %1152 = vmatpush1.bf16.msra.mxu0 0
        %1153 = vmatprep.subr.bf16.mxu0 0
        %1154 = vmatpush1.bf16.msra.mxu0 0
        %1155 = vmatprep.subr.bf16.mxu0 0
        %1156 = vmatpush1.bf16.msra.mxu0 %v1138
        %1157 = vmatprep.subr.bf16.mxu0 0
        %1158 = vmatpush1.bf16.msra.mxu0 %v1137
        %1159 = vmatprep.subr.bf16.mxu0 0
        %1160 = vmatpush1.bf16.msra.mxu0 %v1136
        %1161 = vmatprep.subr.bf16.mxu0 0
        %1162 = vmatpush1.bf16.msra.mxu0 %v1135
        %1163 = vmatprep.subr.bf16.mxu0 0
        %1164 = vmatpush2.bf16.msra.mxu0 0
        %1165 = vmatprep.subr.bf16.mxu0 0
        %1166 = vmatpush2.bf16.msra.mxu0 0
        %1167 = vmatprep.subr.bf16.mxu0 0
        %1168 = vmatpush2.bf16.msra.mxu0 0
        %1169 = vmatprep.subr.bf16.mxu0 0
        %1170 = vmatpush2.bf16.msra.mxu0 0
        %1171 = vmatprep.subr.bf16.mxu0 0
        %1172 = vmatpush2.bf16.msra.mxu0 0
        %1173 = vmatprep.subr.bf16.mxu0 0
        %1174 = vmatpush2.bf16.msra.mxu0 0
        %1175 = vmatprep.subr.bf16.mxu0 0
        %1176 = vmatpush2.bf16.msra.mxu0 0
        %1177 = vmatprep.subr.bf16.mxu0 0
        %1178 = vmatpush2.bf16.msra.mxu0 0
        %1179 = vmatprep.mubr.bf16.mxu0 0
        %1180 = vmatmul.mubr.bf16.gmra.mxu0 %v1145
        %v1181 = vpop.f32.mrf.mxu0
        %v1182 = vadd.f32 %v1117, %v1181
        %v1183 = vpop.f32.mrf.mxu0
        %v1184 = vpop.f32.mrf.mxu0
        %v1185 = vpop.f32.mrf.mxu0
        %1186 = vdwg.mxu0
        %1188 = vrot.lane.b32.xlu0 %v1098, 32
        %v1189 = vpop.permute.xlu0 %1188
        %1192 = vrot.lane.b32.xlu0 %v1182, 64
        %v1193 = vpop.permute.xlu0 %1192
        %v1195 = vsel %vm718, %v1022, %v1189
        %v1196 = vsel %vm1143, %v1195, %v1193
        %vm1197 = vcmask 779264
        %1198 = vst.msk [vmem:[%s613] sm:$0x3] %vm1197, %v1196
      $region96: #{contrastive_forward.2} parent=87 // pred_fallthru
        _
      %p1199 = scmp.lt.s32.totalorder %s32, 0
      %s1200 = scalar_select %p1199, %s32, 0
      %s1201 = smul.addr %s1200, 2
      %s1202 = scalar_lea.vmem %s17, %s1201
      // Predicated region
      $region97: #{contrastive_forward.2} parent=87 // pred_check
        %p1203 = pneg %p432
      $region98: #{contrastive_forward.2} parent=87 // pred_check_branch
        %1205 = sbr.rel (%p1203) target = $region100
      $region99: #{contrastive_forward.2} parent=87 // pred_region
        _
      $region100: #{contrastive_forward.2} parent=87 // pred_fallthru
        _
      // Predicated region
      $region101: #{contrastive_forward.2} parent=87 // pred_check
        %p1206 = pneg %p432
      $region102: #{contrastive_forward.2} parent=87 // pred_check_branch
        %1208 = sbr.rel (%p1206) target = $region104
      $region103: #{contrastive_forward.2} parent=87 // pred_region
        %p1209 = scmp.lt.s32.totalorder %s32, 0
        %s1210 = scalar_select %p1209, %s32, 0
        %s1211 = smul.addr %s1210, 2
        %s1212 = scalar_lea.vmem %s17, %s1211
      $region104: #{contrastive_forward.2} parent=87 // pred_fallthru
        _
    $region88: #{contrastive_forward.2} parent=5 // pred_fallthru
      _
    %p1213 = scmp.le.s32.totalorder 2, %s23
    // Predicated region
    $region105: #{contrastive_forward.2} parent=5 // pred_check
      %p1214 = pneg %p1213
    $region106: #{contrastive_forward.2} parent=5 // pred_check_branch
      %1216 = sbr.rel (%p1214) target = $region108
    $region107: #{contrastive_forward.2} parent=5 // pred_region
      %s1217 = ssub.s32 %s23, 2
    $region108: #{contrastive_forward.2} parent=5 // pred_fallthru
      _
  $region6: #{contrastive_forward.2} parent=0 // loop_footer
    %s27 = sadd.s32 1, %s23
  $region7: #{contrastive_forward.2} parent=0 // loop_footer_branch
    %22 = sbr.rel target = $region3
  $region8: #{contrastive_forward.2} parent=0 // loop_exit
    _

</llo_original>
